<compile_context>
chip_gen: v7x
topology: tpu7x:2x2x1
jax: 0.10.0
libtpu: 0.0.40
codegen_flags: <defaults>
</compile_context>

<pallas_src>
import jax
import jax.numpy as jnp
from jax import lax
from jax.experimental import pallas as pl
from jax.experimental.pallas import tpu as pltpu


def _nonlocal_kernel(x_ref, wth_ref, bth_ref, wpg_ref, bpg_ref,
                     wo_ref, bo_ref, o_ref, phi_sc, wg_sc):
    # Per grid step (b, q):
    #   x_ref:   (1, C, HW)  f32  one image, channels-major (NCHW flattened)
    #   wth_ref: (Ci, C)     bf16 theta 1x1-conv weight
    #   bth_ref: (Ci, 1)     f32  theta bias
    #   wpg_ref: (2*Ci, C)   bf16 stacked [phi; g] 1x1-conv weights
    #   bpg_ref: (2*Ci, 1)   f32  stacked [phi; g] biases
    #   wo_ref:  (C, Ci)     bf16 W 1x1-conv weight with BN scale folded in
    #   bo_ref:  (C, 1)      f32  folded BN bias (includes W's conv bias)
    #   o_ref:   (1, C, TQ)  f32  output tile = TQ query positions
    #   phi_sc:  (Ci, HW)    bf16 scratch: phi projection (per-image)
    #   wg_sc:   (C, HW)     bf16 scratch: wg = W_out @ g   (per-image)
    Ci = wth_ref.shape[0]
    TQ = o_ref.shape[2]
    qi = pl.program_id(1)
    q0 = pl.multiple_of(qi * TQ, TQ)

    # ---- Per-image hoist (runs only on the first query tile of each image) ----
    @pl.when(qi == 0)
    def _():
        x_bf = x_ref[0].astype(jnp.bfloat16)                         # (C, HW)
        # phi / g projections over all key positions: one stacked MXU matmul.
        pg = jnp.dot(wpg_ref[...], x_bf, preferred_element_type=jnp.float32)
        pg = pg + bpg_ref[...]                                       # (2Ci, HW)
        phi_sc[...] = pg[:Ci, :].astype(jnp.bfloat16)                # (Ci, HW)
        g_bf = pg[Ci:, :].astype(jnp.bfloat16)                       # (Ci, HW)
        # Reassociated epilogue weight: wg = W_out @ g (shallow K=Ci, once/image).
        wg = jnp.dot(wo_ref[...], g_bf, preferred_element_type=jnp.float32)
        wg_sc[...] = wg.astype(jnp.bfloat16)                         # (C, HW)

    # ---- Per-query-tile work ----
    xq = x_ref[0, :, pl.ds(q0, TQ)]                                  # (C, TQ) f32
    xq_bf = xq.astype(jnp.bfloat16)

    # theta projection only for this tile's queries.
    th = jnp.dot(wth_ref[...], xq_bf, preferred_element_type=jnp.float32)
    th = (th + bth_ref[...]).astype(jnp.bfloat16)                    # (Ci, TQ)

    # Scores: contract the Ci axis of both operands (no explicit transpose).
    f = lax.dot_general(th, phi_sc[...], (((0,), (0,)), ((), ())),
                        preferred_element_type=jnp.float32)          # (TQ, HW)
    m = jnp.max(f, axis=-1, keepdims=True)
    p = jnp.exp(f - m)
    l = jnp.sum(p, axis=-1, keepdims=True)
    attn = (p * pl.reciprocal(l, approx=True)).astype(jnp.bfloat16)  # (TQ, HW)

    # out[c, q] = sum_j wg[c, j] * attn[q, j]  -> K = HW, fills the MXU depth.
    out = lax.dot_general(wg_sc[...], attn, (((1,), (1,)), ((), ())),
                          preferred_element_type=jnp.float32)        # (C, TQ)
    out = out + bo_ref[...] + xq
    o_ref[0] = out.astype(o_ref.dtype)


def nonlocal_block(x_nchw, params, *, tq=128):
    """NonLocalBlock forward. x_nchw: (B, C, H, W) -> (B, C, H, W)."""
    B, C, H, W = x_nchw.shape
    HW = H * W
    Ci = params["w_theta"].shape[0]
    assert C % 8 == 0 and Ci % 8 == 0, "channel counts must be multiples of 8"

    # Small images: a single query tile per image (grid=(B,)), no recompute,
    # fewer grid steps, lane-dense stores. Also the fallback for odd HW.
    # TODO(synk): for HW not a multiple of 128, prefer padding HW in the
    # wrapper rather than the masked-store fallback below.
    if HW <= 512 or HW % tq != 0:
        tq = HW

    x_flat = x_nchw.reshape(B, C, HW)               # free reshape, no transpose

    # 1x1-conv weights (OIHW) -> matmul slabs, bf16 for the MXU.
    wth = params["w_theta"].reshape(Ci, C).astype(jnp.bfloat16)
    wpg = jnp.concatenate(
        [params["w_phi"].reshape(Ci, C), params["w_g"].reshape(Ci, C)],
        axis=0).astype(jnp.bfloat16)
    bth = params["b_theta"].reshape(Ci, 1).astype(jnp.float32)
    bpg = jnp.concatenate([params["b_phi"], params["b_g"]],
                          axis=0).reshape(2 * Ci, 1).astype(jnp.float32)

    # Fold eval-mode BatchNorm into the output conv: scale -> weights, rest -> bias.
    eps = 1e-5
    scale = params["bn_gamma"] / jnp.sqrt(params["bn_var"] + eps)
    wo = (scale[:, None] * params["w_w"].reshape(C, Ci)).astype(jnp.bfloat16)
    bo = (params["bn_beta"] + scale * (params["b_w"] - params["bn_mean"]))
    bo = bo.reshape(C, 1).astype(jnp.float32)

    out = pl.pallas_call(
        _nonlocal_kernel,
        out_shape=jax.ShapeDtypeStruct((B, C, HW), x_nchw.dtype),
        grid_spec=pltpu.PrefetchScalarGridSpec(
            num_scalar_prefetch=0,
            grid=(B, HW // tq),
            in_specs=[
                pl.BlockSpec((1, C, HW), lambda b, q: (b, 0, 0)),
                pl.BlockSpec((Ci, C), lambda b, q: (0, 0)),
                pl.BlockSpec((Ci, 1), lambda b, q: (0, 0)),
                pl.BlockSpec((2 * Ci, C), lambda b, q: (0, 0)),
                pl.BlockSpec((2 * Ci, 1), lambda b, q: (0, 0)),
                pl.BlockSpec((C, Ci), lambda b, q: (0, 0)),
                pl.BlockSpec((C, 1), lambda b, q: (0, 0)),
            ],
            out_specs=pl.BlockSpec((1, C, tq), lambda b, q: (b, 0, q)),
            scratch_shapes=[
                pltpu.VMEM((Ci, HW), jnp.bfloat16),   # phi (per-image)
                pltpu.VMEM((C, HW), jnp.bfloat16),    # wg = W_out @ g (per-image)
            ],
        ),
        # Batch stays "parallel" (megacore on v7x); the query axis must be
        # "arbitrary" because scratch (phi / wg) is carried across q tiles.
        compiler_params=pltpu.CompilerParams(
            dimension_semantics=("parallel", "arbitrary")),
    )(x_flat, wth, bth, wpg, bpg, wo, bo)
    return out.reshape(B, C, H, W)


def nonlocal_block_ref(x, params):
    """Pure-JAX f32 reference (matches the PyTorch forward, eval-mode BN)."""
    B, C, H, W = x.shape
    xf = x.reshape(B, C, H * W)

    def conv1x1(w, b, v):
        return jnp.einsum("oi,bip->bop", w.reshape(w.shape[0], w.shape[1]),
                          v) + b[None, :, None]

    th = conv1x1(params["w_theta"], params["b_theta"], xf)   # (B, Ci, HW)
    ph = conv1x1(params["w_phi"], params["b_phi"], xf)
    g = conv1x1(params["w_g"], params["b_g"], xf)
    f = jnp.einsum("bci,bcj->bij", th, ph)                   # (B, HW, HW)
    attn = jax.nn.softmax(f, axis=-1)
    y = jnp.einsum("bij,bcj->bci", attn, g)                  # (B, Ci, HW)
    wy = conv1x1(params["w_w"], params["b_w"], y)            # (B, C, HW)
    eps = 1e-5
    scale = params["bn_gamma"] / jnp.sqrt(params["bn_var"] + eps)
    wy = (scale[None, :, None] * (wy - params["bn_mean"][None, :, None])
          + params["bn_beta"][None, :, None])
    return (wy + xf).reshape(B, C, H, W)


def init_nonlocal_params(key, in_channels, inter_channels):
    C, Ci = in_channels, inter_channels
    ks = jax.random.split(key, 8)
    # NOTE: PyTorch's NonLocalBlock initializes the output BN gamma/beta to 0
    # (so z == x at init). We use non-degenerate values here so the whole
    # compute path is exercised; the forward formula is identical.
    return {
        "w_theta": 0.1 * jax.random.normal(ks[0], (Ci, C, 1, 1), jnp.float32),
        "b_theta": 0.01 * jax.random.normal(ks[1], (Ci,), jnp.float32),
        "w_phi": 0.1 * jax.random.normal(ks[2], (Ci, C, 1, 1), jnp.float32),
        "b_phi": 0.01 * jax.random.normal(ks[3], (Ci,), jnp.float32),
        "w_g": 0.1 * jax.random.normal(ks[4], (Ci, C, 1, 1), jnp.float32),
        "b_g": 0.01 * jax.random.normal(ks[5], (Ci,), jnp.float32),
        "w_w": 0.1 * jax.random.normal(ks[6], (C, Ci, 1, 1), jnp.float32),
        "b_w": 0.01 * jax.random.normal(ks[7], (C,), jnp.float32),
        "bn_gamma": 1.0 + 0.05 * jnp.arange(C, dtype=jnp.float32),
        "bn_beta": 0.02 * jnp.arange(C, dtype=jnp.float32),
        "bn_mean": 0.01 * jnp.arange(C, dtype=jnp.float32),
        "bn_var": 1.0 + 0.03 * jnp.arange(C, dtype=jnp.float32),
    }


if __name__ == "__main__":
    key = jax.random.PRNGKey(0)
    kx, kp = jax.random.split(key)

    B, C, H, W = 2, 64, 16, 16            # small, TPU-friendly shapes
    Ci = C // 2                           # inter_channels = in_channels // 2
    x = jax.random.normal(kx, (B, C, H, W), jnp.float32)
    params = init_nonlocal_params(kp, C, Ci)

    z = jax.jit(nonlocal_block)(x, params)
    z = jax.block_until_ready(z)
    assert z.shape == (B, C, H, W), z.shape
    assert z.dtype == jnp.float32

    # Loose check against the f32 reference (kernel uses bf16 matmul inputs).
    z_ref = jax.jit(nonlocal_block_ref)(x, params)
    z_ref = jax.block_until_ready(z_ref)
    rel_err = jnp.linalg.norm(z - z_ref) / jnp.linalg.norm(z_ref)
    assert float(rel_err) < 2e-2, float(rel_err)

    print("KERNEL_OK")
</pallas_src>

<mosaic_0001>
module attributes {stable_mosaic.version = 11 : i64} {
  func.func @_nonlocal_kernel(%arg0: i32, %arg1: i32, %arg2: memref<1x64x256xf32, #tpu.memory_space<vmem>>, %arg3: memref<32x64xbf16, #tpu.memory_space<vmem>>, %arg4: memref<32x1xf32, #tpu.memory_space<vmem>>, %arg5: memref<64x64xbf16, #tpu.memory_space<vmem>>, %arg6: memref<64x1xf32, #tpu.memory_space<vmem>>, %arg7: memref<64x32xbf16, #tpu.memory_space<vmem>>, %arg8: memref<64x1xf32, #tpu.memory_space<vmem>>, %arg9: memref<1x64x256xf32, #tpu.memory_space<vmem>>, %arg10: memref<32x256xbf16, #tpu.memory_space<vmem>>, %arg11: memref<64x256xbf16, #tpu.memory_space<vmem>>) attributes {dimension_semantics = [#tpu.dimension_semantics<parallel>, #tpu.dimension_semantics<arbitrary>], iteration_bounds = array<i64: 2, 1>, scalar_prefetch = 0 : i64, scratch_operands = 2 : i64, tpu.core_type = #tpu.core_type<tc>, window_params = [{transform_indices = @transform_0, window_bounds = array<i64: 1, 64, 256>}, {pipeline_mode = #tpu.pipeline_mode<synchronous>, transform_indices = @transform_1, window_bounds = array<i64: 32, 64>}, {pipeline_mode = #tpu.pipeline_mode<synchronous>, transform_indices = @transform_2, window_bounds = array<i64: 32, 1>}, {pipeline_mode = #tpu.pipeline_mode<synchronous>, transform_indices = @transform_3, window_bounds = array<i64: 64, 64>}, {pipeline_mode = #tpu.pipeline_mode<synchronous>, transform_indices = @transform_4, window_bounds = array<i64: 64, 1>}, {pipeline_mode = #tpu.pipeline_mode<synchronous>, transform_indices = @transform_5, window_bounds = array<i64: 64, 32>}, {pipeline_mode = #tpu.pipeline_mode<synchronous>, transform_indices = @transform_6, window_bounds = array<i64: 64, 1>}, {transform_indices = @transform_7, window_bounds = array<i64: 1, 64, 256>}]} {
    %c256_i32 = arith.constant 256 : i32
    %0 = arith.muli %arg1, %c256_i32 : i32
    %1 = tpu.assume_multiple %0, 256 : i32
    %c0_i32 = arith.constant 0 : i32
    %2 = arith.cmpi eq, %arg1, %c0_i32 : i32
    %3 = arith.extui %2 : i1 to i32
    %c0_i32_0 = arith.constant 0 : i32
    %4 = arith.cmpi ne, %3, %c0_i32_0 : i32
    scf.if %4 {
      %c0_19 = arith.constant 0 : index
      %c0_20 = arith.constant 0 : index
      %c0_21 = arith.constant 0 : index
      %37 = vector.load %arg2[%c0_19, %c0_20, %c0_21] : memref<1x64x256xf32, #tpu.memory_space<vmem>>, vector<1x64x256xf32>
      %38 = vector.shape_cast %37 : vector<1x64x256xf32> to vector<64x256xf32>
      %39 = arith.truncf %38 : vector<64x256xf32> to vector<64x256xbf16>
      %c0_22 = arith.constant 0 : index
      %c0_23 = arith.constant 0 : index
      %40 = vector.load %arg5[%c0_22, %c0_23] : memref<64x64xbf16, #tpu.memory_space<vmem>>, vector<64x64xbf16>
      %cst_24 = arith.constant dense<0.000000e+00> : vector<64x256xf32>
      %41 = tpu.matmul %40, %39, %cst_24 {dimension_numbers = #tpu.dot_dimension_numbers<[1], [0], [0], [1], [0, 0, 1, 1], [], []>} : vector<64x64xbf16>, vector<64x256xbf16>, vector<64x256xf32> -> vector<64x256xf32>
      %c0_25 = arith.constant 0 : index
      %c0_26 = arith.constant 0 : index
      %42 = vector.load %arg6[%c0_25, %c0_26] : memref<64x1xf32, #tpu.memory_space<vmem>>, vector<64x1xf32>
      %43 = vector.broadcast %42 : vector<64x1xf32> to vector<64x256xf32>
      %44 = arith.addf %41, %43 : vector<64x256xf32>
      %45 = vector.extract_strided_slice %44 {offsets = [0, 0], sizes = [32, 256], strides = [1, 1]} : vector<64x256xf32> to vector<32x256xf32>
      %46 = arith.truncf %45 : vector<32x256xf32> to vector<32x256xbf16>
      %c0_27 = arith.constant 0 : index
      %c0_28 = arith.constant 0 : index
      %47 = vector.load %arg10[%c0_27, %c0_28] : memref<32x256xbf16, #tpu.memory_space<vmem>>, vector<32x256xbf16>
      tpu.vector_store %arg10[%c0_27, %c0_28], %46 {strides = array<i32>} : memref<32x256xbf16, #tpu.memory_space<vmem>>, vector<32x256xbf16>,
      %48 = vector.extract_strided_slice %44 {offsets = [32, 0], sizes = [32, 256], strides = [1, 1]} : vector<64x256xf32> to vector<32x256xf32>
      %49 = arith.truncf %48 : vector<32x256xf32> to vector<32x256xbf16>
      %c0_29 = arith.constant 0 : index
      %c0_30 = arith.constant 0 : index
      %50 = vector.load %arg7[%c0_29, %c0_30] : memref<64x32xbf16, #tpu.memory_space<vmem>>, vector<64x32xbf16>
      %cst_31 = arith.constant dense<0.000000e+00> : vector<64x256xf32>
      %51 = tpu.matmul %50, %49, %cst_31 {dimension_numbers = #tpu.dot_dimension_numbers<[1], [0], [0], [1], [0, 0, 1, 1], [], []>} : vector<64x32xbf16>, vector<32x256xbf16>, vector<64x256xf32> -> vector<64x256xf32>
      %52 = arith.truncf %51 : vector<64x256xf32> to vector<64x256xbf16>
      %c0_32 = arith.constant 0 : index
      %c0_33 = arith.constant 0 : index
      %53 = vector.load %arg11[%c0_32, %c0_33] : memref<64x256xbf16, #tpu.memory_space<vmem>>, vector<64x256xbf16>
      tpu.vector_store %arg11[%c0_32, %c0_33], %52 {strides = array<i32>} : memref<64x256xbf16, #tpu.memory_space<vmem>>, vector<64x256xbf16>,
    } else {
    }
    %c0 = arith.constant 0 : index
    %c0_1 = arith.constant 0 : index
    %5 = arith.index_cast %1 : i32 to index
    %6 = vector.load %arg2[%c0, %c0_1, %5] : memref<1x64x256xf32, #tpu.memory_space<vmem>>, vector<1x64x256xf32>
    %7 = vector.shape_cast %6 : vector<1x64x256xf32> to vector<64x256xf32>
    %8 = arith.truncf %7 : vector<64x256xf32> to vector<64x256xbf16>
    %c0_2 = arith.constant 0 : index
    %c0_3 = arith.constant 0 : index
    %9 = vector.load %arg3[%c0_2, %c0_3] : memref<32x64xbf16, #tpu.memory_space<vmem>>, vector<32x64xbf16>
    %cst = arith.constant dense<0.000000e+00> : vector<32x256xf32>
    %10 = tpu.matmul %9, %8, %cst {dimension_numbers = #tpu.dot_dimension_numbers<[1], [0], [0], [1], [0, 0, 1, 1], [], []>} : vector<32x64xbf16>, vector<64x256xbf16>, vector<32x256xf32> -> vector<32x256xf32>
    %c0_4 = arith.constant 0 : index
    %c0_5 = arith.constant 0 : index
    %11 = vector.load %arg4[%c0_4, %c0_5] : memref<32x1xf32, #tpu.memory_space<vmem>>, vector<32x1xf32>
    %12 = vector.broadcast %11 : vector<32x1xf32> to vector<32x256xf32>
    %13 = arith.addf %10, %12 : vector<32x256xf32>
    %14 = arith.truncf %13 : vector<32x256xf32> to vector<32x256xbf16>
    %c0_6 = arith.constant 0 : index
    %c0_7 = arith.constant 0 : index
    %15 = vector.load %arg10[%c0_6, %c0_7] : memref<32x256xbf16, #tpu.memory_space<vmem>>, vector<32x256xbf16>
    %cst_8 = arith.constant dense<0.000000e+00> : vector<256x256xf32>
    %16 = tpu.matmul %14, %15, %cst_8 {dimension_numbers = #tpu.dot_dimension_numbers<[0], [0], [1], [1], [0, 1, 1, 1], [], []>} : vector<32x256xbf16>, vector<32x256xbf16>, vector<256x256xf32> -> vector<256x256xf32>
    %cst_9 = arith.constant dense<0xFF800000> : vector<256xf32>
    %17 = vector.multi_reduction <maximumf>, %16, %cst_9 [1] : vector<256x256xf32> to vector<256xf32>
    %18 = vector.shape_cast %17 : vector<256xf32> to vector<256x1xf32>
    %19 = vector.broadcast %18 : vector<256x1xf32> to vector<256x256xf32>
    %20 = arith.subf %16, %19 : vector<256x256xf32>
    %21 = math.exp %20 : vector<256x256xf32>
    %cst_10 = arith.constant dense<0.000000e+00> : vector<256xf32>
    %22 = vector.multi_reduction <add>, %21, %cst_10 [1] : vector<256x256xf32> to vector<256xf32>
    %23 = vector.shape_cast %22 : vector<256xf32> to vector<256x1xf32>
    %24 = tpu.reciprocal %23 {approx = true} : vector<256x1xf32> -> vector<256x1xf32>
    %25 = vector.broadcast %24 : vector<256x1xf32> to vector<256x256xf32>
    %26 = arith.mulf %21, %25 : vector<256x256xf32>
    %27 = arith.truncf %26 : vector<256x256xf32> to vector<256x256xbf16>
    %c0_11 = arith.constant 0 : index
    %c0_12 = arith.constant 0 : index
    %28 = vector.load %arg11[%c0_11, %c0_12] : memref<64x256xbf16, #tpu.memory_space<vmem>>, vector<64x256xbf16>
    %cst_13 = arith.constant dense<0.000000e+00> : vector<64x256xf32>
    %29 = tpu.matmul %28, %27, %cst_13 {dimension_numbers = #tpu.dot_dimension_numbers<[1], [1], [0], [0], [0, 0, 1, 0], [], []>} : vector<64x256xbf16>, vector<256x256xbf16>, vector<64x256xf32> -> vector<64x256xf32>
    %c0_14 = arith.constant 0 : index
    %c0_15 = arith.constant 0 : index
    %30 = vector.load %arg8[%c0_14, %c0_15] : memref<64x1xf32, #tpu.memory_space<vmem>>, vector<64x1xf32>
    %31 = vector.broadcast %30 : vector<64x1xf32> to vector<64x256xf32>
    %32 = arith.addf %29, %31 : vector<64x256xf32>
    %33 = arith.addf %32, %7 : vector<64x256xf32>
    %c0_16 = arith.constant 0 : index
    %c0_17 = arith.constant 0 : index
    %c0_18 = arith.constant 0 : index
    %34 = vector.load %arg9[%c0_16, %c0_17, %c0_18] : memref<1x64x256xf32, #tpu.memory_space<vmem>>, vector<1x64x256xf32>
    %35 = vector.shape_cast %34 : vector<1x64x256xf32> to vector<64x256xf32>
    %36 = vector.shape_cast %33 : vector<64x256xf32> to vector<1x64x256xf32>
    tpu.vector_store %arg9[%c0_16, %c0_17, %c0_18], %36 {strides = array<i32>} : memref<1x64x256xf32, #tpu.memory_space<vmem>>, vector<1x64x256xf32>,
    return
  }
  func.func @transform_0(%arg0: i32, %arg1: i32) -> (i32, i32, i32) {
    %c0_i32 = arith.constant 0 : i32
    %c0_i32_0 = arith.constant 0 : i32
    %c0_i32_1 = arith.constant 0 : i32
    return %arg0, %c0_i32, %c0_i32_0 : i32, i32, i32
  }
  func.func @transform_1(%arg0: i32, %arg1: i32) -> (i32, i32) {
    %c0_i32 = arith.constant 0 : i32
    %c0_i32_0 = arith.constant 0 : i32
    %c0_i32_1 = arith.constant 0 : i32
    return %c0_i32, %c0_i32_0 : i32, i32
  }
  func.func @transform_2(%arg0: i32, %arg1: i32) -> (i32, i32) {
    %c0_i32 = arith.constant 0 : i32
    %c0_i32_0 = arith.constant 0 : i32
    %c0_i32_1 = arith.constant 0 : i32
    return %c0_i32, %c0_i32_0 : i32, i32
  }
  func.func @transform_3(%arg0: i32, %arg1: i32) -> (i32, i32) {
    %c0_i32 = arith.constant 0 : i32
    %c0_i32_0 = arith.constant 0 : i32
    %c0_i32_1 = arith.constant 0 : i32
    return %c0_i32, %c0_i32_0 : i32, i32
  }
  func.func @transform_4(%arg0: i32, %arg1: i32) -> (i32, i32) {
    %c0_i32 = arith.constant 0 : i32
    %c0_i32_0 = arith.constant 0 : i32
    %c0_i32_1 = arith.constant 0 : i32
    return %c0_i32, %c0_i32_0 : i32, i32
  }
  func.func @transform_5(%arg0: i32, %arg1: i32) -> (i32, i32) {
    %c0_i32 = arith.constant 0 : i32
    %c0_i32_0 = arith.constant 0 : i32
    %c0_i32_1 = arith.constant 0 : i32
    return %c0_i32, %c0_i32_0 : i32, i32
  }
  func.func @transform_6(%arg0: i32, %arg1: i32) -> (i32, i32) {
    %c0_i32 = arith.constant 0 : i32
    %c0_i32_0 = arith.constant 0 : i32
    %c0_i32_1 = arith.constant 0 : i32
    return %c0_i32, %c0_i32_0 : i32, i32
  }
  func.func @transform_7(%arg0: i32, %arg1: i32) -> (i32, i32, i32) {
    %c0_i32 = arith.constant 0 : i32
    %c0_i32_0 = arith.constant 0 : i32
    return %arg0, %c0_i32, %arg1 : i32, i32, i32
  }
}

</mosaic_0001>

<llo_original>
// kernel: nonlocal_block.1
$region0: #{nonlocal_block.1}
  #allocation0 [shape = 'u32[]', space=smem, size = 0x4, offset = 0x4, fixed_abs, tag = 'smem constant byte address 0x4 - core index']
  #allocation1 [shape = 'u32[144,128]{1,0:T(1,128)}', space=vmem, size = 0x12000, scoped, tag = 'internal scratch']
  #allocation2 [shape = 'bf16[32,256]{1,0:T(16,128)(2,1)}', space=vmem, size = 0x4000, scoped, tag = 'scratch operand']
  #allocation3 [shape = 'bf16[64,256]{1,0:T(16,128)(2,1)}', space=vmem, size = 0x8000, scoped, tag = 'scratch operand']
  %s0 = inlined_call_operand.vmem [shape: f32[2,64,256], index: 0, kind: input, shape index: {}]
  %s1 = inlined_call_operand.vmem [shape: bf16[32,64], index: 1, kind: input, shape index: {}]
  %s2 = inlined_call_operand.vmem [shape: f32[32,1], index: 2, kind: input, shape index: {}]
  %s3 = inlined_call_operand.vmem [shape: bf16[64,64], index: 3, kind: input, shape index: {}]
  %s4 = inlined_call_operand.vmem [shape: f32[64,1], index: 4, kind: input, shape index: {}]
  %s5 = inlined_call_operand.vmem [shape: bf16[64,32], index: 5, kind: input, shape index: {}]
  %s6 = inlined_call_operand.vmem [shape: f32[64,1], index: 6, kind: input, shape index: {}]
  %s7 = inlined_call_operand.vmem [shape: f32[2,64,256], index: 7, kind: output, shape index: {}]
  %s8 = sld [smem:[#allocation0]]
  $region65: #{nonlocal_block.1} parent=0
    _
  %s10 = ssub.s32 1, %s8
  %s11 = scalar_select 0, %s10, %s8
  loop: start=0, step=1, limit=4
  $region2: #{nonlocal_block.1} parent=0 // loop_pre_header
    _
  $region3: #{nonlocal_block.1} parent=0 // loop_header
    %s13 = sphi 0, %s17
    %p14 = scmp.ge.s32.totalorder %s13, 4
    %s20 = sphi 0, %s32
    %s21 = sphi 0, %s28
    %s22 = sphi 0, %s20
    %s23 = sphi 0, %s21
    %s24 = sphi 0, %s22
    %s25 = sphi 0, %s23
    %s35 = sphi 0, %s37
    %s38 = sphi 0, %s35
    %s39 = sphi 0, %s38
    %s55 = sphi 0, %s39
    %s59 = sphi 0, %s59
    %s61 = sphi 0, %s59
    %s62 = sphi 0, %s61
    %s76 = sphi 0, %s62
    %s80 = sphi 0, %s80
    %s82 = sphi 0, %s80
    %s83 = sphi 0, %s82
    %s97 = sphi 0, %s83
    %s101 = sphi 0, %s101
    %s103 = sphi 0, %s101
    %s104 = sphi 0, %s103
    %s118 = sphi 0, %s104
    %s122 = sphi 0, %s122
    %s124 = sphi 0, %s122
    %s125 = sphi 0, %s124
    %s139 = sphi 0, %s125
    %s143 = sphi 0, %s143
    %s145 = sphi 0, %s143
    %s146 = sphi 0, %s145
    %s160 = sphi 0, %s146
    %s164 = sphi 0, %s164
    %s166 = sphi 0, %s164
    %s167 = sphi 0, %s166
    %s181 = sphi 0, %s167
    %s189 = sphi 0, %s191
    %s192 = sphi 0, %s189
    %s193 = sphi 0, %s192
    %s209 = sphi 0, %s193
  $region4: #{nonlocal_block.1} parent=0 // loop_header_branch
    %16 = sbr.rel (%p14) target = $region8
  $region5: #{nonlocal_block.1} parent=0 // loop_body
    %s18 = ssub.s32 %s13, 1
    %s19 = ssub.s32 %s13, 2
    %s26 = sadd.s32 1, %s21
    %p27 = scmp.ge.s32.totalorder %s26, 1
    %s28 = scalar_select %p27, 0, %s26
    %s29 = sadd.s32 1, %s20
    %s30 = scalar_select %p27, %s29, %s20
    %p31 = scmp.ge.s32.totalorder %s30, 2
    %s32 = scalar_select %p31, 0, %s30
    %s33 = ssub.s32 %s20, %s32
    %p34 = scmp.eq.s32.totalorder %s33, 0
    %s36 = sadd.s32 %s35, 1
    %s37 = scalar_select %p34, %s35, %s36
    %p40 = pneg %p34
    %p41 = scmp.eq.s32.totalorder %s13, 1
    %p42 = por %p40, %p41
    %p43 = scmp.ne.s32.totalorder %s35, %s38
    %p44 = scmp.eq.s32.totalorder %s13, 0
    %p45 = por %p43, %p44
    %p46 = scmp.ne.s32.totalorder %s35, %s38
    %p47 = scmp.eq.s32.totalorder %s18, 1
    %p48 = por %p46, %p47
    %p49 = scmp.ne.s32.totalorder %s38, %s39
    %p50 = scmp.eq.s32.totalorder %s18, 0
    %p51 = por %p49, %p50
    %p52 = scmp.ne.s32.totalorder %s38, %s39
    %p53 = scmp.eq.s32.totalorder %s19, 1
    %p54 = por %p52, %p53
    %p56 = scmp.ne.s32.totalorder %s39, %s55
    %p57 = scmp.eq.s32.totalorder %s19, 0
    %p58 = por %p56, %p57
    %s60 = sadd.s32 %s59, 1
    %p63 = scmp.eq.s32.totalorder %s13, 1
    %p64 = scmp.ne.s32.totalorder %s59, %s61
    %p65 = scmp.eq.s32.totalorder %s13, 0
    %p66 = por %p64, %p65
    %p67 = scmp.ne.s32.totalorder %s59, %s61
    %p68 = scmp.eq.s32.totalorder %s18, 1
    %p69 = por %p67, %p68
    %p70 = scmp.ne.s32.totalorder %s61, %s62
    %p71 = scmp.eq.s32.totalorder %s18, 0
    %p72 = por %p70, %p71
    %p73 = scmp.ne.s32.totalorder %s61, %s62
    %p74 = scmp.eq.s32.totalorder %s19, 1
    %p75 = por %p73, %p74
    %p77 = scmp.ne.s32.totalorder %s62, %s76
    %p78 = scmp.eq.s32.totalorder %s19, 0
    %p79 = por %p77, %p78
    %s81 = sadd.s32 %s80, 1
    %p84 = scmp.eq.s32.totalorder %s13, 1
    %p85 = scmp.ne.s32.totalorder %s80, %s82
    %p86 = scmp.eq.s32.totalorder %s13, 0
    %p87 = por %p85, %p86
    %p88 = scmp.ne.s32.totalorder %s80, %s82
    %p89 = scmp.eq.s32.totalorder %s18, 1
    %p90 = por %p88, %p89
    %p91 = scmp.ne.s32.totalorder %s82, %s83
    %p92 = scmp.eq.s32.totalorder %s18, 0
    %p93 = por %p91, %p92
    %p94 = scmp.ne.s32.totalorder %s82, %s83
    %p95 = scmp.eq.s32.totalorder %s19, 1
    %p96 = por %p94, %p95
    %p98 = scmp.ne.s32.totalorder %s83, %s97
    %p99 = scmp.eq.s32.totalorder %s19, 0
    %p100 = por %p98, %p99
    %s102 = sadd.s32 %s101, 1
    %p105 = scmp.eq.s32.totalorder %s13, 1
    %p106 = scmp.ne.s32.totalorder %s101, %s103
    %p107 = scmp.eq.s32.totalorder %s13, 0
    %p108 = por %p106, %p107
    %p109 = scmp.ne.s32.totalorder %s101, %s103
    %p110 = scmp.eq.s32.totalorder %s18, 1
    %p111 = por %p109, %p110
    %p112 = scmp.ne.s32.totalorder %s103, %s104
    %p113 = scmp.eq.s32.totalorder %s18, 0
    %p114 = por %p112, %p113
    %p115 = scmp.ne.s32.totalorder %s103, %s104
    %p116 = scmp.eq.s32.totalorder %s19, 1
    %p117 = por %p115, %p116
    %p119 = scmp.ne.s32.totalorder %s104, %s118
    %p120 = scmp.eq.s32.totalorder %s19, 0
    %p121 = por %p119, %p120
    %s123 = sadd.s32 %s122, 1
    %p126 = scmp.eq.s32.totalorder %s13, 1
    %p127 = scmp.ne.s32.totalorder %s122, %s124
    %p128 = scmp.eq.s32.totalorder %s13, 0
    %p129 = por %p127, %p128
    %p130 = scmp.ne.s32.totalorder %s122, %s124
    %p131 = scmp.eq.s32.totalorder %s18, 1
    %p132 = por %p130, %p131
    %p133 = scmp.ne.s32.totalorder %s124, %s125
    %p134 = scmp.eq.s32.totalorder %s18, 0
    %p135 = por %p133, %p134
    %p136 = scmp.ne.s32.totalorder %s124, %s125
    %p137 = scmp.eq.s32.totalorder %s19, 1
    %p138 = por %p136, %p137
    %p140 = scmp.ne.s32.totalorder %s125, %s139
    %p141 = scmp.eq.s32.totalorder %s19, 0
    %p142 = por %p140, %p141
    %s144 = sadd.s32 %s143, 1
    %p147 = scmp.eq.s32.totalorder %s13, 1
    %p148 = scmp.ne.s32.totalorder %s143, %s145
    %p149 = scmp.eq.s32.totalorder %s13, 0
    %p150 = por %p148, %p149
    %p151 = scmp.ne.s32.totalorder %s143, %s145
    %p152 = scmp.eq.s32.totalorder %s18, 1
    %p153 = por %p151, %p152
    %p154 = scmp.ne.s32.totalorder %s145, %s146
    %p155 = scmp.eq.s32.totalorder %s18, 0
    %p156 = por %p154, %p155
    %p157 = scmp.ne.s32.totalorder %s145, %s146
    %p158 = scmp.eq.s32.totalorder %s19, 1
    %p159 = por %p157, %p158
    %p161 = scmp.ne.s32.totalorder %s146, %s160
    %p162 = scmp.eq.s32.totalorder %s19, 0
    %p163 = por %p161, %p162
    %s165 = sadd.s32 %s164, 1
    %p168 = scmp.eq.s32.totalorder %s13, 1
    %p169 = scmp.ne.s32.totalorder %s164, %s166
    %p170 = scmp.eq.s32.totalorder %s13, 0
    %p171 = por %p169, %p170
    %p172 = scmp.ne.s32.totalorder %s164, %s166
    %p173 = scmp.eq.s32.totalorder %s18, 1
    %p174 = por %p172, %p173
    %p175 = scmp.ne.s32.totalorder %s166, %s167
    %p176 = scmp.eq.s32.totalorder %s18, 0
    %p177 = por %p175, %p176
    %p178 = scmp.ne.s32.totalorder %s166, %s167
    %p179 = scmp.eq.s32.totalorder %s19, 1
    %p180 = por %p178, %p179
    %p182 = scmp.ne.s32.totalorder %s167, %s181
    %p183 = scmp.eq.s32.totalorder %s19, 0
    %p184 = por %p182, %p183
    %s185 = ssub.s32 %s20, %s32
    %s186 = ssub.s32 %s21, %s28
    %s187 = sor.u32 %s185, %s186
    %p188 = scmp.eq.s32.totalorder %s187, 0
    %s190 = sadd.s32 %s189, 1
    %s191 = scalar_select %p188, %s189, %s190
    %p194 = pneg %p188
    %p195 = scmp.eq.s32.totalorder %s13, 1
    %p196 = por %p194, %p195
    %p197 = scmp.ne.s32.totalorder %s189, %s192
    %p198 = scmp.eq.s32.totalorder %s13, 0
    %p199 = por %p197, %p198
    %p200 = scmp.ne.s32.totalorder %s189, %s192
    %p201 = scmp.eq.s32.totalorder %s18, 1
    %p202 = por %p200, %p201
    %p203 = scmp.ne.s32.totalorder %s192, %s193
    %p204 = scmp.eq.s32.totalorder %s18, 0
    %p205 = por %p203, %p204
    %p206 = scmp.ne.s32.totalorder %s192, %s193
    %p207 = scmp.eq.s32.totalorder %s19, 1
    %p208 = por %p206, %p207
    %p210 = scmp.ne.s32.totalorder %s193, %s209
    %p211 = scmp.eq.s32.totalorder %s19, 0
    %p212 = por %p210, %p211
    %p213 = scmp.le.s32.totalorder 1, %s13
    %p214 = scmp.lt.s32.totalorder %s13, 3
    %p215 = pnand %p213, %p214
    %p216 = pneg %p215
    // Predicated region
    $region9: #{nonlocal_block.1} parent=5 // pred_check
      _
    $region10: #{nonlocal_block.1} parent=5 // pred_check_branch
      %218 = sbr.rel (%p215) target = $region12
    $region11: #{nonlocal_block.1} parent=5 // pred_region
      %s219 = ssub.s32 %s13, 1
      // Predicated region
      $region13: #{nonlocal_block.1} parent=11 // pred_check
        %p220 = pneg %p72
      $region14: #{nonlocal_block.1} parent=11 // pred_check_branch
        %222 = sbr.rel (%p220) target = $region16
      $region15: #{nonlocal_block.1} parent=11 // pred_region
        _
      $region16: #{nonlocal_block.1} parent=11 // pred_fallthru
        _
      // Predicated region
      $region17: #{nonlocal_block.1} parent=11 // pred_check
        %p223 = pneg %p93
      $region18: #{nonlocal_block.1} parent=11 // pred_check_branch
        %225 = sbr.rel (%p223) target = $region20
      $region19: #{nonlocal_block.1} parent=11 // pred_region
        _
      $region20: #{nonlocal_block.1} parent=11 // pred_fallthru
        _
      // Predicated region
      $region21: #{nonlocal_block.1} parent=11 // pred_check
        %p226 = pneg %p114
      $region22: #{nonlocal_block.1} parent=11 // pred_check_branch
        %228 = sbr.rel (%p226) target = $region24
      $region23: #{nonlocal_block.1} parent=11 // pred_region
        _
      $region24: #{nonlocal_block.1} parent=11 // pred_fallthru
        _
      // Predicated region
      $region25: #{nonlocal_block.1} parent=11 // pred_check
        %p229 = pneg %p135
      $region26: #{nonlocal_block.1} parent=11 // pred_check_branch
        %231 = sbr.rel (%p229) target = $region28
      $region27: #{nonlocal_block.1} parent=11 // pred_region
        _
      $region28: #{nonlocal_block.1} parent=11 // pred_fallthru
        _
      // Predicated region
      $region29: #{nonlocal_block.1} parent=11 // pred_check
        %p232 = pneg %p156
      $region30: #{nonlocal_block.1} parent=11 // pred_check_branch
        %234 = sbr.rel (%p232) target = $region32
      $region31: #{nonlocal_block.1} parent=11 // pred_region
        _
      $region32: #{nonlocal_block.1} parent=11 // pred_fallthru
        _
      // Predicated region
      $region33: #{nonlocal_block.1} parent=11 // pred_check
        %p235 = pneg %p177
      $region34: #{nonlocal_block.1} parent=11 // pred_check_branch
        %237 = sbr.rel (%p235) target = $region36
      $region35: #{nonlocal_block.1} parent=11 // pred_region
        _
      $region36: #{nonlocal_block.1} parent=11 // pred_fallthru
        _
    $region12: #{nonlocal_block.1} parent=5 // pred_fallthru
      _
    %p238 = scmp.lt.s32.totalorder %s13, 2
    // Predicated region
    $region37: #{nonlocal_block.1} parent=5 // pred_check
      %p239 = pneg %p238
    $region38: #{nonlocal_block.1} parent=5 // pred_check_branch
      %241 = sbr.rel (%p239) target = $region40
    $region39: #{nonlocal_block.1} parent=5 // pred_region
      // Predicated region
      $region41: #{nonlocal_block.1} parent=39 // pred_check
        %p242 = pneg %p45
      $region42: #{nonlocal_block.1} parent=39 // pred_check_branch
        %244 = sbr.rel (%p242) target = $region44
      $region43: #{nonlocal_block.1} parent=39 // pred_region
        %p245 = scmp.lt.s32.totalorder %s20, 1
        %s246 = scalar_select %p245, %s20, 1
        %s247 = smul.addr %s246, 16
        %s248 = smul.addr %s247, 8
        %s249 = scalar_lea.vmem %s0, %s248
      $region44: #{nonlocal_block.1} parent=39 // pred_fallthru
        _
    $region40: #{nonlocal_block.1} parent=5 // pred_fallthru
      _
    %p250 = scmp.le.s32.totalorder 1, %s13
    %p251 = scmp.lt.s32.totalorder %s13, 3
    %p252 = pnand %p250, %p251
    %p253 = pneg %p252
    // Predicated region
    $region45: #{nonlocal_block.1} parent=5 // pred_check
      _
    $region46: #{nonlocal_block.1} parent=5 // pred_check_branch
      %255 = sbr.rel (%p252) target = $region48
    $region47: #{nonlocal_block.1} parent=5 // pred_region
      %s256 = ssub.s32 %s13, 1
      %p257 = scmp.lt.s32.totalorder %s22, 1
      %s258 = scalar_select %p257, %s22, 1
      %s259 = smul.addr %s258, 16
      %s260 = smul.addr %s259, 8
      %s261 = scalar_lea.vmem %s0, %s260
      %p262 = pneg %p51
      %p263 = pneg %p48
      %p264 = pneg %p72
      %p265 = pneg %p69
      %p266 = pneg %p93
      %p267 = pneg %p90
      %p268 = pneg %p114
      %p269 = pneg %p111
      %p270 = pneg %p135
      %p271 = pneg %p132
      %p272 = pneg %p156
      %p273 = pneg %p153
      %p274 = pneg %p177
      %p275 = pneg %p174
      %p276 = pneg %p205
      %p277 = pneg %p202
      %s278 = smul.u32 2, %s23
      %p279 = scmp.lt.s32.totalorder %s22, 1
      %s280 = scalar_select %p279, %s22, 1
      %p281 = scmp.lt.s32.totalorder %s278, 1
      %s282 = scalar_select %p281, %s278, 1
      %s283 = smul.addr %s280, 16
      %s284 = sadd.s32 %s282, %s283
      %s285 = smul.addr %s284, 8
      %s286 = scalar_lea.vmem %s7, %s285
      %p287 = scmp.lt.s32.totalorder %s22, 1
      %s288 = scalar_select %p287, %s22, 1
      %s289 = smul.addr %s288, 16
      %s290 = smul.addr %s289, 8
      %s291 = scalar_lea.vmem %s0, %s290
      %s292 = smul.u32 2, %s23
      %p293 = scmp.lt.s32.totalorder %s22, 1
      %s294 = scalar_select %p293, %s22, 1
      %p295 = scmp.lt.s32.totalorder %s292, 1
      %s296 = scalar_select %p295, %s292, 1
      %s297 = smul.addr %s294, 16
      %s298 = sadd.s32 %s296, %s297
      %s299 = smul.addr %s298, 8
      %s300 = scalar_lea.vmem %s7, %s299
      %s301 = smul.u32 2, %s23
      %s303 = smul.u32 %s23, 256
      %p304 = scmp.eq.s32.totalorder %s23, 0
      // Predicated region
      $region49: #{nonlocal_block.1} parent=47 // pred_check
        %p305 = pneg %p304
      $region50: #{nonlocal_block.1} parent=47 // pred_check_branch
        %307 = sbr.rel (%p305) target = $region52
      $region51: #{nonlocal_block.1} parent=47 // pred_region
        %v308 = vld [vmem:[%s291] sm:$0xff]
        %v309 = vld [vmem:[%s291 + $0x8] sm:$0xff]
        %v310 = vld [vmem:[%s291 + $0x10] sm:$0xff]
        %v311 = vld [vmem:[%s291 + $0x18] sm:$0xff]
        %v312 = vld [vmem:[%s291 + $0x20] sm:$0xff]
        %v313 = vld [vmem:[%s291 + $0x28] sm:$0xff]
        %v314 = vld [vmem:[%s291 + $0x30] sm:$0xff]
        %v315 = vld [vmem:[%s291 + $0x38] sm:$0xff]
        %v316 = vld [vmem:[%s291 + $0x40] sm:$0xff]
        %v317 = vld [vmem:[%s291 + $0x48] sm:$0xff]
        %v318 = vld [vmem:[%s291 + $0x50] sm:$0xff]
        %v319 = vld [vmem:[%s291 + $0x58] sm:$0xff]
        %v320 = vld [vmem:[%s291 + $0x60] sm:$0xff]
        %v321 = vld [vmem:[%s291 + $0x68] sm:$0xff]
        %v322 = vld [vmem:[%s291 + $0x70] sm:$0xff]
        %v323 = vld [vmem:[%s291 + $0x78] sm:$0xff]
        %v324 = vpack.c.bf16 %v310, %v308
        %v325 = vpack.c.bf16 %v311, %v309
        %v326 = vpack.c.bf16 %v314, %v312
        %v327 = vpack.c.bf16 %v315, %v313
        %v328 = vpack.c.bf16 %v318, %v316
        %v329 = vpack.c.bf16 %v319, %v317
        %v330 = vpack.c.bf16 %v322, %v320
        %v331 = vpack.c.bf16 %v323, %v321
        %v332 = vld [vmem:[%s3] sm:$0xf]
        %v333 = vld [vmem:[%s3 + $0x4] sm:$0xf]
        %v334 = vld [vmem:[%s3 + $0x8] sm:$0xf]
        %v335 = vld [vmem:[%s3 + $0xc] sm:$0xf]
        %v336 = vld [vmem:[%s3 + $0x10] sm:$0xf]
        %v337 = vld [vmem:[%s3 + $0x14] sm:$0xf]
        %v338 = vld [vmem:[%s3 + $0x18] sm:$0xf]
        %v339 = vld [vmem:[%s3 + $0x1c] sm:$0xf]
        %v340 = vld [vmem:[%s4] sm:$0xff]
        %v341 = vld [vmem:[%s4 + $0x8] sm:$0xff]
        %v342 = vld [vmem:[%s4 + $0x10] sm:$0xff]
        %v343 = vld [vmem:[%s4 + $0x18] sm:$0xff]
        %v344 = vld [vmem:[%s4 + $0x20] sm:$0xff]
        %v345 = vld [vmem:[%s4 + $0x28] sm:$0xff]
        %v346 = vld [vmem:[%s4 + $0x30] sm:$0xff]
        %v347 = vld [vmem:[%s4 + $0x38] sm:$0xff]
        %349 = vset.pattern.permute.xlu0 0
        %350 = vperm.xlu0 %349, %v340
        %v351 = vpop.permute.xlu0 %350
        %354 = vset.pattern.permute.xlu0 0
        %355 = vperm.xlu0 %354, %v341
        %v356 = vpop.permute.xlu0 %355
        %359 = vset.pattern.permute.xlu0 0
        %360 = vperm.xlu0 %359, %v342
        %v361 = vpop.permute.xlu0 %360
        %364 = vset.pattern.permute.xlu0 0
        %365 = vperm.xlu0 %364, %v343
        %v366 = vpop.permute.xlu0 %365
        %369 = vset.pattern.permute.xlu0 0
        %370 = vperm.xlu0 %369, %v344
        %v371 = vpop.permute.xlu0 %370
        %374 = vset.pattern.permute.xlu0 0
        %375 = vperm.xlu0 %374, %v345
        %v376 = vpop.permute.xlu0 %375
        %379 = vset.pattern.permute.xlu0 0
        %380 = vperm.xlu0 %379, %v346
        %v381 = vpop.permute.xlu0 %380
        %384 = vset.pattern.permute.xlu0 0
        %385 = vperm.xlu0 %384, %v347
        %v386 = vpop.permute.xlu0 %385
        %v396 = vunpack.c.l.b16 %v332
        %v397 = vunpack.c.l.b16 %v333
        %v398 = vunpack.c.l.b16 %v334
        %v399 = vunpack.c.l.b16 %v335
        %v400 = vunpack.c.l.b16 %v336
        %v401 = vunpack.c.l.b16 %v337
        %v402 = vunpack.c.l.b16 %v338
        %v403 = vunpack.c.l.b16 %v339
        %v404 = vpack.c.b16 %v397, %v396
        %v405 = vpack.c.b16 %v399, %v398
        %v406 = vpack.c.b16 %v401, %v400
        %v407 = vpack.c.b16 %v403, %v402
        %vm408 = vcmask 523264
        %v410 = vsel %vm408, %v404, 0
        %v413 = vsel %vm408, %v405, 0
        %v416 = vsel %vm408, %v406, 0
        %v419 = vsel %vm408, %v407, 0
        %421 = vmatprep.subr.bf16.mxu0 %v325
        %422 = vmatpush1.bf16.msra.mxu0 %v324
        %423 = vmatprep.subr.bf16.mxu0 %v327
        %424 = vmatpush1.bf16.msra.mxu0 %v326
        %425 = vmatprep.subr.bf16.mxu0 %v329
        %426 = vmatpush1.bf16.msra.mxu0 %v328
        %427 = vmatprep.subr.bf16.mxu0 %v331
        %428 = vmatpush1.bf16.msra.mxu0 %v330
        %429 = vmatprep.subr.bf16.mxu0 0
        %430 = vmatpush1.bf16.msra.mxu0 0
        %431 = vmatprep.subr.bf16.mxu0 0
        %432 = vmatpush1.bf16.msra.mxu0 0
        %433 = vmatprep.subr.bf16.mxu0 0
        %434 = vmatpush1.bf16.msra.mxu0 0
        %435 = vmatprep.subr.bf16.mxu0 0
        %436 = vmatpush1.bf16.msra.mxu0 0
        %437 = vmatprep.subr.bf16.mxu0 0
        %438 = vmatpush1.bf16.msra.mxu0 0
        %439 = vmatprep.subr.bf16.mxu0 0
        %440 = vmatpush1.bf16.msra.mxu0 0
        %441 = vmatprep.subr.bf16.mxu0 0
        %442 = vmatpush1.bf16.msra.mxu0 0
        %443 = vmatprep.subr.bf16.mxu0 0
        %444 = vmatpush1.bf16.msra.mxu0 0
        %445 = vmatprep.subr.bf16.mxu0 0
        %446 = vmatpush1.bf16.msra.mxu0 0
        %447 = vmatprep.subr.bf16.mxu0 0
        %448 = vmatpush1.bf16.msra.mxu0 0
        %449 = vmatprep.subr.bf16.mxu0 0
        %450 = vmatpush1.bf16.msra.mxu0 0
        %451 = vmatprep.subr.bf16.mxu0 0
        %452 = vmatpush1.bf16.msra.mxu0 0
        %453 = vmatprep.mubr.bf16.mxu0 0
        %454 = vmatmul.mubr.bf16.gmra.mrb[0].mxu0 %v410
        %v455 = vpop.f32.mrb[0].mxu0
        %v456 = vadd.f32 %v351, %v455
        %v457 = vpop.f32.mrb[0].mxu0
        %v458 = vadd.f32 %v351, %v457
        %v459 = vpop.f32.mrb[0].mxu0
        %v460 = vadd.f32 %v356, %v459
        %v461 = vpop.f32.mrb[0].mxu0
        %v462 = vadd.f32 %v356, %v461
        %463 = vmatprep.mubr.bf16.mxu0 0
        %464 = vmatmul.mubr.bf16.gmra.mrb[0].mxu0 %v413
        %v465 = vpop.f32.mrb[0].mxu0
        %v466 = vadd.f32 %v361, %v465
        %v467 = vpop.f32.mrb[0].mxu0
        %v468 = vadd.f32 %v361, %v467
        %v469 = vpop.f32.mrb[0].mxu0
        %v470 = vadd.f32 %v366, %v469
        %v471 = vpop.f32.mrb[0].mxu0
        %v472 = vadd.f32 %v366, %v471
        %473 = vmatprep.mubr.bf16.mxu0 0
        %474 = vmatmul.mubr.bf16.gmra.mrb[0].mxu0 %v416
        %v475 = vpop.f32.mrb[0].mxu0
        %v476 = vadd.f32 %v371, %v475
        %v477 = vpop.f32.mrb[0].mxu0
        %v478 = vadd.f32 %v371, %v477
        %v479 = vpop.f32.mrb[0].mxu0
        %v480 = vadd.f32 %v376, %v479
        %v481 = vpop.f32.mrb[0].mxu0
        %v482 = vadd.f32 %v376, %v481
        %483 = vmatprep.mubr.bf16.mxu0 0
        %484 = vmatmul.mubr.bf16.gmra.mrb[0].mxu0 %v419
        %v485 = vpop.f32.mrb[0].mxu0
        %v486 = vadd.f32 %v381, %v485
        %v487 = vpop.f32.mrb[0].mxu0
        %v488 = vadd.f32 %v381, %v487
        %v489 = vpop.f32.mrb[0].mxu0
        %v490 = vadd.f32 %v386, %v489
        %v491 = vpop.f32.mrb[0].mxu0
        %v492 = vadd.f32 %v386, %v491
        %493 = vdwg.mxu0
        %v494 = vpack.c.bf16 %v460, %v456
        %v495 = vpack.c.bf16 %v462, %v458
        %v496 = vpack.c.bf16 %v470, %v466
        %v497 = vpack.c.bf16 %v472, %v468
        %498 = vst [vmem:[#allocation2] sm:$0xff] %v494
        %499 = vst [vmem:[#allocation2 + $0x8] sm:$0xff] %v495
        %500 = vst [vmem:[#allocation2 + $0x10] sm:$0xff] %v496
        %501 = vst [vmem:[#allocation2 + $0x18] sm:$0xff] %v497
        %v502 = vpack.c.bf16 %v480, %v476
        %v503 = vpack.c.bf16 %v482, %v478
        %v504 = vpack.c.bf16 %v490, %v486
        %v505 = vpack.c.bf16 %v492, %v488
        %v506 = vld [vmem:[%s5] sm:$0xf]
        %v507 = vld [vmem:[%s5 + $0x4] sm:$0xf]
        %v508 = vld [vmem:[%s5 + $0x8] sm:$0xf]
        %v509 = vld [vmem:[%s5 + $0xc] sm:$0xf]
        %v510 = vld [vmem:[%s5 + $0x10] sm:$0xf]
        %v511 = vld [vmem:[%s5 + $0x14] sm:$0xf]
        %v512 = vld [vmem:[%s5 + $0x18] sm:$0xf]
        %v513 = vld [vmem:[%s5 + $0x1c] sm:$0xf]
        %v522 = vunpack.c.l.b16 %v506
        %v523 = vunpack.c.l.b16 %v507
        %v524 = vunpack.c.l.b16 %v508
        %v525 = vunpack.c.l.b16 %v509
        %v526 = vunpack.c.l.b16 %v510
        %v527 = vunpack.c.l.b16 %v511
        %v528 = vunpack.c.l.b16 %v512
        %v529 = vunpack.c.l.b16 %v513
        %v530 = vpack.c.b16 %v523, %v522
        %v531 = vpack.c.b16 %v525, %v524
        %v532 = vpack.c.b16 %v527, %v526
        %v533 = vpack.c.b16 %v529, %v528
        %vm534 = vcmask 261120
        %v536 = vsel %vm534, %v530, 0
        %v539 = vsel %vm534, %v531, 0
        %v542 = vsel %vm534, %v532, 0
        %v545 = vsel %vm534, %v533, 0
        %547 = vmatprep.subr.bf16.mxu0 %v503
        %548 = vmatpush1.bf16.msra.mxu0 %v502
        %549 = vmatprep.subr.bf16.mxu0 %v505
        %550 = vmatpush1.bf16.msra.mxu0 %v504
        %551 = vmatprep.subr.bf16.mxu0 0
        %552 = vmatpush1.bf16.msra.mxu0 0
        %553 = vmatprep.subr.bf16.mxu0 0
        %554 = vmatpush1.bf16.msra.mxu0 0
        %555 = vmatprep.subr.bf16.mxu0 0
        %556 = vmatpush1.bf16.msra.mxu0 0
        %557 = vmatprep.subr.bf16.mxu0 0
        %558 = vmatpush1.bf16.msra.mxu0 0
        %559 = vmatprep.subr.bf16.mxu0 0
        %560 = vmatpush1.bf16.msra.mxu0 0
        %561 = vmatprep.subr.bf16.mxu0 0
        %562 = vmatpush1.bf16.msra.mxu0 0
        %563 = vmatprep.subr.bf16.mxu0 0
        %564 = vmatpush1.bf16.msra.mxu0 0
        %565 = vmatprep.subr.bf16.mxu0 0
        %566 = vmatpush1.bf16.msra.mxu0 0
        %567 = vmatprep.subr.bf16.mxu0 0
        %568 = vmatpush1.bf16.msra.mxu0 0
        %569 = vmatprep.subr.bf16.mxu0 0
        %570 = vmatpush1.bf16.msra.mxu0 0
        %571 = vmatprep.subr.bf16.mxu0 0
        %572 = vmatpush1.bf16.msra.mxu0 0
        %573 = vmatprep.subr.bf16.mxu0 0
        %574 = vmatpush1.bf16.msra.mxu0 0
        %575 = vmatprep.subr.bf16.mxu0 0
        %576 = vmatpush1.bf16.msra.mxu0 0
        %577 = vmatprep.subr.bf16.mxu0 0
        %578 = vmatpush1.bf16.msra.mxu0 0
        %579 = vmatprep.mubr.bf16.mxu0 0
        %580 = vmatmul.mubr.bf16.gmra.mrb[0].mxu0 %v536
        %v581 = vpop.f32.mrb[0].mxu0
        %v582 = vadd.f32 0.0, %v581
        %v583 = vpop.f32.mrb[0].mxu0
        %v584 = vadd.f32 0.0, %v583
        %v585 = vpop.f32.mrb[0].mxu0
        %v586 = vadd.f32 0.0, %v585
        %v587 = vpop.f32.mrb[0].mxu0
        %v588 = vadd.f32 0.0, %v587
        %589 = vmatprep.mubr.bf16.mxu0 0
        %590 = vmatmul.mubr.bf16.gmra.mrb[0].mxu0 %v539
        %v591 = vpop.f32.mrb[0].mxu0
        %v592 = vadd.f32 0.0, %v591
        %v593 = vpop.f32.mrb[0].mxu0
        %v594 = vadd.f32 0.0, %v593
        %v595 = vpop.f32.mrb[0].mxu0
        %v596 = vadd.f32 0.0, %v595
        %v597 = vpop.f32.mrb[0].mxu0
        %v598 = vadd.f32 0.0, %v597
        %599 = vmatprep.mubr.bf16.mxu0 0
        %600 = vmatmul.mubr.bf16.gmra.mrb[0].mxu0 %v542
        %v601 = vpop.f32.mrb[0].mxu0
        %v602 = vadd.f32 0.0, %v601
        %v603 = vpop.f32.mrb[0].mxu0
        %v604 = vadd.f32 0.0, %v603
        %v605 = vpop.f32.mrb[0].mxu0
        %v606 = vadd.f32 0.0, %v605
        %v607 = vpop.f32.mrb[0].mxu0
        %v608 = vadd.f32 0.0, %v607
        %609 = vmatprep.mubr.bf16.mxu0 0
        %610 = vmatmul.mubr.bf16.gmra.mrb[0].mxu0 %v545
        %v611 = vpop.f32.mrb[0].mxu0
        %v612 = vadd.f32 0.0, %v611
        %v613 = vpop.f32.mrb[0].mxu0
        %v614 = vadd.f32 0.0, %v613
        %v615 = vpop.f32.mrb[0].mxu0
        %v616 = vadd.f32 0.0, %v615
        %v617 = vpop.f32.mrb[0].mxu0
        %v618 = vadd.f32 0.0, %v617
        %619 = vdwg.mxu0
        %v620 = vpack.c.bf16 %v586, %v582
        %v621 = vpack.c.bf16 %v588, %v584
        %v622 = vpack.c.bf16 %v596, %v592
        %v623 = vpack.c.bf16 %v598, %v594
        %v624 = vpack.c.bf16 %v606, %v602
        %v625 = vpack.c.bf16 %v608, %v604
        %v626 = vpack.c.bf16 %v616, %v612
        %v627 = vpack.c.bf16 %v618, %v614
        %628 = vst [vmem:[#allocation3] sm:$0xff] %v620
        %629 = vst [vmem:[#allocation3 + $0x8] sm:$0xff] %v621
        %630 = vst [vmem:[#allocation3 + $0x10] sm:$0xff] %v622
        %631 = vst [vmem:[#allocation3 + $0x18] sm:$0xff] %v623
        %632 = vst [vmem:[#allocation3 + $0x20] sm:$0xff] %v624
        %633 = vst [vmem:[#allocation3 + $0x28] sm:$0xff] %v625
        %634 = vst [vmem:[#allocation3 + $0x30] sm:$0xff] %v626
        %635 = vst [vmem:[#allocation3 + $0x38] sm:$0xff] %v627
      $region52: #{nonlocal_block.1} parent=47 // pred_fallthru
        _
      %s636 = sshra.s32 %s303, 7
      %s637 = sand.u32 %s303, 127
      %s638 = smul.addr %s636, 8
      %s639 = scalar_lea.vmem %s291, %s638
      %v640 = vld [vmem:[%s639] sm:$0xff]
      %v641 = vld [vmem:[%s639 + $0x8] sm:$0xff]
      %v642 = vld [vmem:[%s639 + $0x10] sm:$0xff]
      %v643 = vld [vmem:[%s639 + $0x18] sm:$0xff]
      %v644 = vld [vmem:[%s639 + $0x20] sm:$0xff]
      %v645 = vld [vmem:[%s639 + $0x28] sm:$0xff]
      %v646 = vld [vmem:[%s639 + $0x30] sm:$0xff]
      %v647 = vld [vmem:[%s639 + $0x38] sm:$0xff]
      %v648 = vld [vmem:[%s639 + $0x40] sm:$0xff]
      %v649 = vld [vmem:[%s639 + $0x48] sm:$0xff]
      %v650 = vld [vmem:[%s639 + $0x50] sm:$0xff]
      %v651 = vld [vmem:[%s639 + $0x58] sm:$0xff]
      %v652 = vld [vmem:[%s639 + $0x60] sm:$0xff]
      %v653 = vld [vmem:[%s639 + $0x68] sm:$0xff]
      %v654 = vld [vmem:[%s639 + $0x70] sm:$0xff]
      %v655 = vld [vmem:[%s639 + $0x78] sm:$0xff]
      %v656 = vpack.c.bf16 %v642, %v640
      %v657 = vpack.c.bf16 %v643, %v641
      %v658 = vpack.c.bf16 %v646, %v644
      %v659 = vpack.c.bf16 %v647, %v645
      %v660 = vpack.c.bf16 %v650, %v648
      %v661 = vpack.c.bf16 %v651, %v649
      %v662 = vpack.c.bf16 %v654, %v652
      %v663 = vpack.c.bf16 %v655, %v653
      %v664 = vld [vmem:[%s1] sm:$0xf]
      %v665 = vld [vmem:[%s1 + $0x4] sm:$0xf]
      %v666 = vld [vmem:[%s1 + $0x8] sm:$0xf]
      %v667 = vld [vmem:[%s1 + $0xc] sm:$0xf]
      %v668 = vld [vmem:[%s2] sm:$0xff]
      %v669 = vld [vmem:[%s2 + $0x8] sm:$0xff]
      %v670 = vld [vmem:[%s2 + $0x10] sm:$0xff]
      %v671 = vld [vmem:[%s2 + $0x18] sm:$0xff]
      %673 = vset.pattern.permute.xlu0 0
      %674 = vperm.xlu0 %673, %v668
      %v675 = vpop.permute.xlu0 %674
      %678 = vset.pattern.permute.xlu0 0
      %679 = vperm.xlu0 %678, %v669
      %v680 = vpop.permute.xlu0 %679
      %683 = vset.pattern.permute.xlu0 0
      %684 = vperm.xlu0 %683, %v670
      %v685 = vpop.permute.xlu0 %684
      %688 = vset.pattern.permute.xlu0 0
      %689 = vperm.xlu0 %688, %v671
      %v690 = vpop.permute.xlu0 %689
      %v696 = vunpack.c.l.b16 %v664
      %v697 = vunpack.c.l.b16 %v665
      %v698 = vunpack.c.l.b16 %v666
      %v699 = vunpack.c.l.b16 %v667
      %v700 = vpack.c.b16 %v697, %v696
      %v701 = vpack.c.b16 %v699, %v698
      %vm702 = vcmask 523264
      %v704 = vsel %vm702, %v700, 0
      %v707 = vsel %vm702, %v701, 0
      %709 = vmatprep.subr.bf16.mxu0 %v657
      %710 = vmatpush1.bf16.msra.mxu0 %v656
      %711 = vmatprep.subr.bf16.mxu0 %v659
      %712 = vmatpush1.bf16.msra.mxu0 %v658
      %713 = vmatprep.subr.bf16.mxu0 %v661
      %714 = vmatpush1.bf16.msra.mxu0 %v660
      %715 = vmatprep.subr.bf16.mxu0 %v663
      %716 = vmatpush1.bf16.msra.mxu0 %v662
      %717 = vmatprep.subr.bf16.mxu0 0
      %718 = vmatpush1.bf16.msra.mxu0 0
      %719 = vmatprep.subr.bf16.mxu0 0
      %720 = vmatpush1.bf16.msra.mxu0 0
      %721 = vmatprep.subr.bf16.mxu0 0
      %722 = vmatpush1.bf16.msra.mxu0 0
      %723 = vmatprep.subr.bf16.mxu0 0
      %724 = vmatpush1.bf16.msra.mxu0 0
      %725 = vmatprep.subr.bf16.mxu0 0
      %726 = vmatpush1.bf16.msra.mxu0 0
      %727 = vmatprep.subr.bf16.mxu0 0
      %728 = vmatpush1.bf16.msra.mxu0 0
      %729 = vmatprep.subr.bf16.mxu0 0
      %730 = vmatpush1.bf16.msra.mxu0 0
      %731 = vmatprep.subr.bf16.mxu0 0
      %732 = vmatpush1.bf16.msra.mxu0 0
      %733 = vmatprep.subr.bf16.mxu0 0
      %734 = vmatpush1.bf16.msra.mxu0 0
      %735 = vmatprep.subr.bf16.mxu0 0
      %736 = vmatpush1.bf16.msra.mxu0 0
      %737 = vmatprep.subr.bf16.mxu0 0
      %738 = vmatpush1.bf16.msra.mxu0 0
      %739 = vmatprep.subr.bf16.mxu0 0
      %740 = vmatpush1.bf16.msra.mxu0 0
      %741 = vmatprep.mubr.bf16.mxu0 0
      %742 = vmatmul.mubr.bf16.gmra.mrb[0].mxu0 %v704
      %v743 = vpop.f32.mrb[0].mxu0
      %v744 = vadd.f32 %v675, %v743
      %v745 = vpop.f32.mrb[0].mxu0
      %v746 = vadd.f32 %v675, %v745
      %v747 = vpop.f32.mrb[0].mxu0
      %v748 = vadd.f32 %v680, %v747
      %v749 = vpop.f32.mrb[0].mxu0
      %v750 = vadd.f32 %v680, %v749
      %751 = vmatprep.mubr.bf16.mxu0 0
      %752 = vmatmul.mubr.bf16.gmra.mrb[0].mxu0 %v707
      %v753 = vpop.f32.mrb[0].mxu0
      %v754 = vadd.f32 %v685, %v753
      %v755 = vpop.f32.mrb[0].mxu0
      %v756 = vadd.f32 %v685, %v755
      %v757 = vpop.f32.mrb[0].mxu0
      %v758 = vadd.f32 %v690, %v757
      %v759 = vpop.f32.mrb[0].mxu0
      %v760 = vadd.f32 %v690, %v759
      %761 = vdwg.mxu0
      %v762 = vpack.c.bf16 %v748, %v744
      %v763 = vpack.c.bf16 %v750, %v746
      %v764 = vpack.c.bf16 %v758, %v754
      %v765 = vpack.c.bf16 %v760, %v756
      %v766 = vld [vmem:[#allocation2] sm:$0xff]
      %v767 = vld [vmem:[#allocation2 + $0x8] sm:$0xff]
      %v768 = vld [vmem:[#allocation2 + $0x10] sm:$0xff]
      %v769 = vld [vmem:[#allocation2 + $0x18] sm:$0xff]
      %770 = vxpose.xlu0.c.b16.start [1/8] %v762, 128
      %771 = vxpose.xlu0.c.b16.cont [2/8] %v764, 128
      %772 = vxpose.xlu0.c.b16.cont [3/8] 0, 128
      %773 = vxpose.xlu0.c.b16.cont [4/8] 0, 128
      %774 = vxpose.xlu0.c.b16.cont [5/8] 0, 128
      %775 = vxpose.xlu0.c.b16.cont [6/8] 0, 128
      %776 = vxpose.xlu0.c.b16.cont [7/8] 0, 128
      %777 = vxpose.xlu0.c.b16.end [8/8] 0, 128
      %v778 = vpop.trf.xlu0
      %v779 = vpop.trf.xlu0
      %v780 = vpop.trf.xlu0
      %v781 = vpop.trf.xlu0
      %v782 = vpop.trf.xlu0
      %v783 = vpop.trf.xlu0
      %v784 = vpop.trf.xlu0
      %v785 = vpop.trf.xlu0
      %786 = vxpose.xlu0.c.b16.start [1/8] %v763, 128
      %787 = vxpose.xlu0.c.b16.cont [2/8] %v765, 128
      %788 = vxpose.xlu0.c.b16.cont [3/8] 0, 128
      %789 = vxpose.xlu0.c.b16.cont [4/8] 0, 128
      %790 = vxpose.xlu0.c.b16.cont [5/8] 0, 128
      %791 = vxpose.xlu0.c.b16.cont [6/8] 0, 128
      %792 = vxpose.xlu0.c.b16.cont [7/8] 0, 128
      %793 = vxpose.xlu0.c.b16.end [8/8] 0, 128
      %v794 = vpop.trf.xlu0
      %v795 = vpop.trf.xlu0
      %v796 = vpop.trf.xlu0
      %v797 = vpop.trf.xlu0
      %v798 = vpop.trf.xlu0
      %v799 = vpop.trf.xlu0
      %v800 = vpop.trf.xlu0
      %v801 = vpop.trf.xlu0
      %vm802 = vcmask 261120
      %v804 = vsel %vm802, %v778, 0
      %v807 = vsel %vm802, %v779, 0
      %v810 = vsel %vm802, %v780, 0
      %v813 = vsel %vm802, %v781, 0
      %v816 = vsel %vm802, %v782, 0
      %v819 = vsel %vm802, %v783, 0
      %v822 = vsel %vm802, %v784, 0
      %v825 = vsel %vm802, %v785, 0
      %v828 = vsel %vm802, %v794, 0
      %v831 = vsel %vm802, %v795, 0
      %v834 = vsel %vm802, %v796, 0
      %v837 = vsel %vm802, %v797, 0
      %v840 = vsel %vm802, %v798, 0
      %v843 = vsel %vm802, %v799, 0
      %v846 = vsel %vm802, %v800, 0
      %v849 = vsel %vm802, %v801, 0
      %851 = vmatprep.subr.bf16.mxu0 %v767
      %852 = vmatpush1.bf16.msra.mxu0 %v766
      %853 = vmatprep.subr.bf16.mxu0 %v769
      %854 = vmatpush1.bf16.msra.mxu0 %v768
      %855 = vmatprep.subr.bf16.mxu0 0
      %856 = vmatpush1.bf16.msra.mxu0 0
      %857 = vmatprep.subr.bf16.mxu0 0
      %858 = vmatpush1.bf16.msra.mxu0 0
      %859 = vmatprep.subr.bf16.mxu0 0
      %860 = vmatpush1.bf16.msra.mxu0 0
      %861 = vmatprep.subr.bf16.mxu0 0
      %862 = vmatpush1.bf16.msra.mxu0 0
      %863 = vmatprep.subr.bf16.mxu0 0
      %864 = vmatpush1.bf16.msra.mxu0 0
      %865 = vmatprep.subr.bf16.mxu0 0
      %866 = vmatpush1.bf16.msra.mxu0 0
      %867 = vmatprep.subr.bf16.mxu0 0
      %868 = vmatpush1.bf16.msra.mxu0 0
      %869 = vmatprep.subr.bf16.mxu0 0
      %870 = vmatpush1.bf16.msra.mxu0 0
      %871 = vmatprep.subr.bf16.mxu0 0
      %872 = vmatpush1.bf16.msra.mxu0 0
      %873 = vmatprep.subr.bf16.mxu0 0
      %874 = vmatpush1.bf16.msra.mxu0 0
      %875 = vmatprep.subr.bf16.mxu0 0
      %876 = vmatpush1.bf16.msra.mxu0 0
      %877 = vmatprep.subr.bf16.mxu0 0
      %878 = vmatpush1.bf16.msra.mxu0 0
      %879 = vmatprep.subr.bf16.mxu0 0
      %880 = vmatpush1.bf16.msra.mxu0 0
      %881 = vmatprep.subr.bf16.mxu0 0
      %882 = vmatpush1.bf16.msra.mxu0 0
      %883 = vmatprep.mubr.bf16.mxu0 0
      %884 = vmatmul.mubr.bf16.gmra.mrb[0].mxu0 %v804
      %v885 = vpop.f32.mrb[0].mxu0
      %v886 = vadd.f32 0.0, %v885
      %v887 = vpop.f32.mrb[0].mxu0
      %v888 = vadd.f32 0.0, %v887
      %v889 = vpop.f32.mrb[0].mxu0
      %v890 = vadd.f32 0.0, %v889
      %v891 = vpop.f32.mrb[0].mxu0
      %v892 = vadd.f32 0.0, %v891
      %893 = vmatprep.mubr.bf16.mxu0 0
      %894 = vmatmul.mubr.bf16.gmra.mrb[0].mxu0 %v807
      %v895 = vpop.f32.mrb[0].mxu0
      %v896 = vadd.f32 0.0, %v895
      %v897 = vpop.f32.mrb[0].mxu0
      %v898 = vadd.f32 0.0, %v897
      %v899 = vpop.f32.mrb[0].mxu0
      %v900 = vadd.f32 0.0, %v899
      %v901 = vpop.f32.mrb[0].mxu0
      %v902 = vadd.f32 0.0, %v901
      %903 = vmatprep.mubr.bf16.mxu0 0
      %904 = vmatmul.mubr.bf16.gmra.mrb[0].mxu0 %v810
      %v905 = vpop.f32.mrb[0].mxu0
      %v906 = vadd.f32 0.0, %v905
      %v907 = vpop.f32.mrb[0].mxu0
      %v908 = vadd.f32 0.0, %v907
      %v909 = vpop.f32.mrb[0].mxu0
      %v910 = vadd.f32 0.0, %v909
      %v911 = vpop.f32.mrb[0].mxu0
      %v912 = vadd.f32 0.0, %v911
      %913 = vmatprep.mubr.bf16.mxu0 0
      %914 = vmatmul.mubr.bf16.gmra.mrb[0].mxu0 %v813
      %v915 = vpop.f32.mrb[0].mxu0
      %v916 = vadd.f32 0.0, %v915
      %v917 = vpop.f32.mrb[0].mxu0
      %v918 = vadd.f32 0.0, %v917
      %v919 = vpop.f32.mrb[0].mxu0
      %v920 = vadd.f32 0.0, %v919
      %v921 = vpop.f32.mrb[0].mxu0
      %v922 = vadd.f32 0.0, %v921
      %923 = vmatprep.mubr.bf16.mxu0 0
      %924 = vmatmul.mubr.bf16.gmra.mrb[0].mxu0 %v816
      %v925 = vpop.f32.mrb[0].mxu0
      %v926 = vadd.f32 0.0, %v925
      %v927 = vpop.f32.mrb[0].mxu0
      %v928 = vadd.f32 0.0, %v927
      %v929 = vpop.f32.mrb[0].mxu0
      %v930 = vadd.f32 0.0, %v929
      %v931 = vpop.f32.mrb[0].mxu0
      %v932 = vadd.f32 0.0, %v931
      %933 = vmatprep.mubr.bf16.mxu0 0
      %934 = vmatmul.mubr.bf16.gmra.mrb[0].mxu0 %v819
      %v935 = vpop.f32.mrb[0].mxu0
      %v936 = vadd.f32 0.0, %v935
      %v937 = vpop.f32.mrb[0].mxu0
      %v938 = vadd.f32 0.0, %v937
      %v939 = vpop.f32.mrb[0].mxu0
      %v940 = vadd.f32 0.0, %v939
      %v941 = vpop.f32.mrb[0].mxu0
      %v942 = vadd.f32 0.0, %v941
      %943 = vmatprep.mubr.bf16.mxu0 0
      %944 = vmatmul.mubr.bf16.gmra.mrb[0].mxu0 %v822
      %v945 = vpop.f32.mrb[0].mxu0
      %v946 = vadd.f32 0.0, %v945
      %v947 = vpop.f32.mrb[0].mxu0
      %v948 = vadd.f32 0.0, %v947
      %v949 = vpop.f32.mrb[0].mxu0
      %v950 = vadd.f32 0.0, %v949
      %v951 = vpop.f32.mrb[0].mxu0
      %v952 = vadd.f32 0.0, %v951
      %953 = vmatprep.mubr.bf16.mxu0 0
      %954 = vmatmul.mubr.bf16.gmra.mrb[0].mxu0 %v825
      %v955 = vpop.f32.mrb[0].mxu0
      %v956 = vadd.f32 0.0, %v955
      %v957 = vpop.f32.mrb[0].mxu0
      %v958 = vadd.f32 0.0, %v957
      %v959 = vpop.f32.mrb[0].mxu0
      %v960 = vadd.f32 0.0, %v959
      %v961 = vpop.f32.mrb[0].mxu0
      %v962 = vadd.f32 0.0, %v961
      %963 = vmatprep.mubr.bf16.mxu0 0
      %964 = vmatmul.mubr.bf16.gmra.mrb[0].mxu0 %v828
      %v965 = vpop.f32.mrb[0].mxu0
      %v966 = vadd.f32 0.0, %v965
      %v967 = vpop.f32.mrb[0].mxu0
      %v968 = vadd.f32 0.0, %v967
      %v969 = vpop.f32.mrb[0].mxu0
      %v970 = vadd.f32 0.0, %v969
      %v971 = vpop.f32.mrb[0].mxu0
      %v972 = vadd.f32 0.0, %v971
      %973 = vmatprep.mubr.bf16.mxu0 0
      %974 = vmatmul.mubr.bf16.gmra.mrb[0].mxu0 %v831
      %v975 = vpop.f32.mrb[0].mxu0
      %v976 = vadd.f32 0.0, %v975
      %v977 = vpop.f32.mrb[0].mxu0
      %v978 = vadd.f32 0.0, %v977
      %v979 = vpop.f32.mrb[0].mxu0
      %v980 = vadd.f32 0.0, %v979
      %v981 = vpop.f32.mrb[0].mxu0
      %v982 = vadd.f32 0.0, %v981
      %983 = vmatprep.mubr.bf16.mxu0 0
      %984 = vmatmul.mubr.bf16.gmra.mrb[0].mxu0 %v834
      %v985 = vpop.f32.mrb[0].mxu0
      %v986 = vadd.f32 0.0, %v985
      %v987 = vpop.f32.mrb[0].mxu0
      %v988 = vadd.f32 0.0, %v987
      %v989 = vpop.f32.mrb[0].mxu0
      %v990 = vadd.f32 0.0, %v989
      %v991 = vpop.f32.mrb[0].mxu0
      %v992 = vadd.f32 0.0, %v991
      %993 = vmatprep.mubr.bf16.mxu0 0
      %994 = vmatmul.mubr.bf16.gmra.mrb[0].mxu0 %v837
      %v995 = vpop.f32.mrb[0].mxu0
      %v996 = vadd.f32 0.0, %v995
      %v997 = vpop.f32.mrb[0].mxu0
      %v998 = vadd.f32 0.0, %v997
      %v999 = vpop.f32.mrb[0].mxu0
      %v1000 = vadd.f32 0.0, %v999
      %v1001 = vpop.f32.mrb[0].mxu0
      %v1002 = vadd.f32 0.0, %v1001
      %1003 = vmatprep.mubr.bf16.mxu0 0
      %1004 = vmatmul.mubr.bf16.gmra.mrb[0].mxu0 %v840
      %v1005 = vpop.f32.mrb[0].mxu0
      %v1006 = vadd.f32 0.0, %v1005
      %v1007 = vpop.f32.mrb[0].mxu0
      %v1008 = vadd.f32 0.0, %v1007
      %v1009 = vpop.f32.mrb[0].mxu0
      %v1010 = vadd.f32 0.0, %v1009
      %v1011 = vpop.f32.mrb[0].mxu0
      %v1012 = vadd.f32 0.0, %v1011
      %1013 = vmatprep.mubr.bf16.mxu0 0
      %1014 = vmatmul.mubr.bf16.gmra.mrb[0].mxu0 %v843
      %v1015 = vpop.f32.mrb[0].mxu0
      %v1016 = vadd.f32 0.0, %v1015
      %v1017 = vpop.f32.mrb[0].mxu0
      %v1018 = vadd.f32 0.0, %v1017
      %v1019 = vpop.f32.mrb[0].mxu0
      %v1020 = vadd.f32 0.0, %v1019
      %v1021 = vpop.f32.mrb[0].mxu0
      %v1022 = vadd.f32 0.0, %v1021
      %1023 = vmatprep.mubr.bf16.mxu0 0
      %1024 = vmatmul.mubr.bf16.gmra.mrb[0].mxu0 %v846
      %v1025 = vpop.f32.mrb[0].mxu0
      %v1026 = vadd.f32 0.0, %v1025
      %v1027 = vpop.f32.mrb[0].mxu0
      %v1028 = vadd.f32 0.0, %v1027
      %v1029 = vpop.f32.mrb[0].mxu0
      %v1030 = vadd.f32 0.0, %v1029
      %v1031 = vpop.f32.mrb[0].mxu0
      %v1032 = vadd.f32 0.0, %v1031
      %1033 = vmatprep.mubr.bf16.mxu0 0
      %1034 = vmatmul.mubr.bf16.gmra.mrb[0].mxu0 %v849
      %v1035 = vpop.f32.mrb[0].mxu0
      %v1036 = vadd.f32 0.0, %v1035
      %v1037 = vpop.f32.mrb[0].mxu0
      %v1038 = vadd.f32 0.0, %v1037
      %v1039 = vpop.f32.mrb[0].mxu0
      %v1040 = vadd.f32 0.0, %v1039
      %v1041 = vpop.f32.mrb[0].mxu0
      %v1042 = vadd.f32 0.0, %v1041
      %1043 = vdwg.mxu0
      %v1044 = vmax.f32 %v886, %v888
      %1045 = vmax.xlane.f32.xlu0 %v1044
      %v1046 = vpop.xlane.xlu0 %1045
      %v1047 = vmax.f32 %v890, %v892
      %1048 = vmax.xlane.f32.xlu0 %v1047
      %v1049 = vpop.xlane.xlu0 %1048
      %v1050 = vmax.f32 %v896, %v898
      %1051 = vmax.xlane.f32.xlu0 %v1050
      %v1052 = vpop.xlane.xlu0 %1051
      %v1053 = vmax.f32 %v900, %v902
      %1054 = vmax.xlane.f32.xlu0 %v1053
      %v1055 = vpop.xlane.xlu0 %1054
      %v1056 = vmax.f32 %v906, %v908
      %1057 = vmax.xlane.f32.xlu0 %v1056
      %v1058 = vpop.xlane.xlu0 %1057
      %v1059 = vmax.f32 %v910, %v912
      %1060 = vmax.xlane.f32.xlu0 %v1059
      %v1061 = vpop.xlane.xlu0 %1060
      %v1062 = vmax.f32 %v916, %v918
      %1063 = vmax.xlane.f32.xlu0 %v1062
      %v1064 = vpop.xlane.xlu0 %1063
      %v1065 = vmax.f32 %v920, %v922
      %1066 = vmax.xlane.f32.xlu0 %v1065
      %v1067 = vpop.xlane.xlu0 %1066
      %v1068 = vmax.f32 %v926, %v928
      %1069 = vmax.xlane.f32.xlu0 %v1068
      %v1070 = vpop.xlane.xlu0 %1069
      %v1071 = vmax.f32 %v930, %v932
      %1072 = vmax.xlane.f32.xlu0 %v1071
      %v1073 = vpop.xlane.xlu0 %1072
      %v1074 = vmax.f32 %v936, %v938
      %1075 = vmax.xlane.f32.xlu0 %v1074
      %v1076 = vpop.xlane.xlu0 %1075
      %v1077 = vmax.f32 %v940, %v942
      %1078 = vmax.xlane.f32.xlu0 %v1077
      %v1079 = vpop.xlane.xlu0 %1078
      %v1080 = vmax.f32 %v946, %v948
      %1081 = vmax.xlane.f32.xlu0 %v1080
      %v1082 = vpop.xlane.xlu0 %1081
      %v1083 = vmax.f32 %v950, %v952
      %1084 = vmax.xlane.f32.xlu0 %v1083
      %v1085 = vpop.xlane.xlu0 %1084
      %v1086 = vmax.f32 %v956, %v958
      %1087 = vmax.xlane.f32.xlu0 %v1086
      %v1088 = vpop.xlane.xlu0 %1087
      %v1089 = vmax.f32 %v960, %v962
      %1090 = vmax.xlane.f32.xlu0 %v1089
      %v1091 = vpop.xlane.xlu0 %1090
      %v1092 = vmax.f32 %v966, %v968
      %1093 = vmax.xlane.f32.xlu0 %v1092
      %v1094 = vpop.xlane.xlu0 %1093
      %v1095 = vmax.f32 %v970, %v972
      %1096 = vmax.xlane.f32.xlu0 %v1095
      %v1097 = vpop.xlane.xlu0 %1096
      %v1098 = vmax.f32 %v976, %v978
      %1099 = vmax.xlane.f32.xlu0 %v1098
      %v1100 = vpop.xlane.xlu0 %1099
      %v1101 = vmax.f32 %v980, %v982
      %1102 = vmax.xlane.f32.xlu0 %v1101
      %v1103 = vpop.xlane.xlu0 %1102
      %v1104 = vmax.f32 %v986, %v988
      %1105 = vmax.xlane.f32.xlu0 %v1104
      %v1106 = vpop.xlane.xlu0 %1105
      %v1107 = vmax.f32 %v990, %v992
      %1108 = vmax.xlane.f32.xlu0 %v1107
      %v1109 = vpop.xlane.xlu0 %1108
      %v1110 = vmax.f32 %v996, %v998
      %1111 = vmax.xlane.f32.xlu0 %v1110
      %v1112 = vpop.xlane.xlu0 %1111
      %v1113 = vmax.f32 %v1000, %v1002
      %1114 = vmax.xlane.f32.xlu0 %v1113
      %v1115 = vpop.xlane.xlu0 %1114
      %v1116 = vmax.f32 %v1006, %v1008
      %1117 = vmax.xlane.f32.xlu0 %v1116
      %v1118 = vpop.xlane.xlu0 %1117
      %v1119 = vmax.f32 %v1010, %v1012
      %1120 = vmax.xlane.f32.xlu0 %v1119
      %v1121 = vpop.xlane.xlu0 %1120
      %v1122 = vmax.f32 %v1016, %v1018
      %1123 = vmax.xlane.f32.xlu0 %v1122
      %v1124 = vpop.xlane.xlu0 %1123
      %v1125 = vmax.f32 %v1020, %v1022
      %1126 = vmax.xlane.f32.xlu0 %v1125
      %v1127 = vpop.xlane.xlu0 %1126
      %v1128 = vmax.f32 %v1026, %v1028
      %1129 = vmax.xlane.f32.xlu0 %v1128
      %v1130 = vpop.xlane.xlu0 %1129
      %v1131 = vmax.f32 %v1030, %v1032
      %1132 = vmax.xlane.f32.xlu0 %v1131
      %v1133 = vpop.xlane.xlu0 %1132
      %v1134 = vmax.f32 %v1036, %v1038
      %1135 = vmax.xlane.f32.xlu0 %v1134
      %v1136 = vpop.xlane.xlu0 %1135
      %v1137 = vmax.f32 %v1040, %v1042
      %1138 = vmax.xlane.f32.xlu0 %v1137
      %v1139 = vpop.xlane.xlu0 %1138
      %v1140 = vsub.f32 %v886, %v1046
      %v1141 = vsub.f32 %v888, %v1046
      %v1142 = vsub.f32 %v890, %v1049
      %v1143 = vsub.f32 %v892, %v1049
      %v1144 = vsub.f32 %v896, %v1052
      %v1145 = vsub.f32 %v898, %v1052
      %v1146 = vsub.f32 %v900, %v1055
      %v1147 = vsub.f32 %v902, %v1055
      %v1148 = vsub.f32 %v906, %v1058
      %v1149 = vsub.f32 %v908, %v1058
      %v1150 = vsub.f32 %v910, %v1061
      %v1151 = vsub.f32 %v912, %v1061
      %v1152 = vsub.f32 %v916, %v1064
      %v1153 = vsub.f32 %v918, %v1064
      %v1154 = vsub.f32 %v920, %v1067
      %v1155 = vsub.f32 %v922, %v1067
      %v1156 = vsub.f32 %v926, %v1070
      %v1157 = vsub.f32 %v928, %v1070
      %v1158 = vsub.f32 %v930, %v1073
      %v1159 = vsub.f32 %v932, %v1073
      %v1160 = vsub.f32 %v936, %v1076
      %v1161 = vsub.f32 %v938, %v1076
      %v1162 = vsub.f32 %v940, %v1079
      %v1163 = vsub.f32 %v942, %v1079
      %v1164 = vsub.f32 %v946, %v1082
      %v1165 = vsub.f32 %v948, %v1082
      %v1166 = vsub.f32 %v950, %v1085
      %v1167 = vsub.f32 %v952, %v1085
      %v1168 = vsub.f32 %v956, %v1088
      %v1169 = vsub.f32 %v958, %v1088
      %v1170 = vsub.f32 %v960, %v1091
      %v1171 = vsub.f32 %v962, %v1091
      %v1172 = vsub.f32 %v966, %v1094
      %v1173 = vsub.f32 %v968, %v1094
      %v1174 = vsub.f32 %v970, %v1097
      %v1175 = vsub.f32 %v972, %v1097
      %v1176 = vsub.f32 %v976, %v1100
      %v1177 = vsub.f32 %v978, %v1100
      %v1178 = vsub.f32 %v980, %v1103
      %v1179 = vsub.f32 %v982, %v1103
      %v1180 = vsub.f32 %v986, %v1106
      %v1181 = vsub.f32 %v988, %v1106
      %v1182 = vsub.f32 %v990, %v1109
      %v1183 = vsub.f32 %v992, %v1109
      %v1184 = vsub.f32 %v996, %v1112
      %v1185 = vsub.f32 %v998, %v1112
      %v1186 = vsub.f32 %v1000, %v1115
      %v1187 = vsub.f32 %v1002, %v1115
      %v1188 = vsub.f32 %v1006, %v1118
      %v1189 = vsub.f32 %v1008, %v1118
      %v1190 = vsub.f32 %v1010, %v1121
      %v1191 = vsub.f32 %v1012, %v1121
      %v1192 = vsub.f32 %v1016, %v1124
      %v1193 = vsub.f32 %v1018, %v1124
      %v1194 = vsub.f32 %v1020, %v1127
      %v1195 = vsub.f32 %v1022, %v1127
      %v1196 = vsub.f32 %v1026, %v1130
      %v1197 = vsub.f32 %v1028, %v1130
      %v1198 = vsub.f32 %v1030, %v1133
      %v1199 = vsub.f32 %v1032, %v1133
      %v1200 = vsub.f32 %v1036, %v1136
      %v1201 = vsub.f32 %v1038, %v1136
      %v1202 = vsub.f32 %v1040, %v1139
      %v1203 = vsub.f32 %v1042, %v1139
      %v1204 = vmul.f32 %v1140, 1.442695
      %v1205 = vpow.pop %v1204
      %v1206 = vmul.f32 %v1141, 1.442695
      %v1207 = vpow.pop %v1206
      %v1208 = vmul.f32 %v1142, 1.442695
      %v1209 = vpow.pop %v1208
      %v1210 = vmul.f32 %v1143, 1.442695
      %v1211 = vpow.pop %v1210
      %v1212 = vmul.f32 %v1144, 1.442695
      %v1213 = vpow.pop %v1212
      %v1214 = vmul.f32 %v1145, 1.442695
      %v1215 = vpow.pop %v1214
      %v1216 = vmul.f32 %v1146, 1.442695
      %v1217 = vpow.pop %v1216
      %v1218 = vmul.f32 %v1147, 1.442695
      %v1219 = vpow.pop %v1218
      %v1220 = vmul.f32 %v1148, 1.442695
      %v1221 = vpow.pop %v1220
      %v1222 = vmul.f32 %v1149, 1.442695
      %v1223 = vpow.pop %v1222
      %v1224 = vmul.f32 %v1150, 1.442695
      %v1225 = vpow.pop %v1224
      %v1226 = vmul.f32 %v1151, 1.442695
      %v1227 = vpow.pop %v1226
      %v1228 = vmul.f32 %v1152, 1.442695
      %v1229 = vpow.pop %v1228
      %v1230 = vmul.f32 %v1153, 1.442695
      %v1231 = vpow.pop %v1230
      %v1232 = vmul.f32 %v1154, 1.442695
      %v1233 = vpow.pop %v1232
      %v1234 = vmul.f32 %v1155, 1.442695
      %v1235 = vpow.pop %v1234
      %v1236 = vmul.f32 %v1156, 1.442695
      %v1237 = vpow.pop %v1236
      %v1238 = vmul.f32 %v1157, 1.442695
      %v1239 = vpow.pop %v1238
      %v1240 = vmul.f32 %v1158, 1.442695
      %v1241 = vpow.pop %v1240
      %v1242 = vmul.f32 %v1159, 1.442695
      %v1243 = vpow.pop %v1242
      %v1244 = vmul.f32 %v1160, 1.442695
      %v1245 = vpow.pop %v1244
      %v1246 = vmul.f32 %v1161, 1.442695
      %v1247 = vpow.pop %v1246
      %v1248 = vmul.f32 %v1162, 1.442695
      %v1249 = vpow.pop %v1248
      %v1250 = vmul.f32 %v1163, 1.442695
      %v1251 = vpow.pop %v1250
      %v1252 = vmul.f32 %v1164, 1.442695
      %v1253 = vpow.pop %v1252
      %v1254 = vmul.f32 %v1165, 1.442695
      %v1255 = vpow.pop %v1254
      %v1256 = vmul.f32 %v1166, 1.442695
      %v1257 = vpow.pop %v1256
      %v1258 = vmul.f32 %v1167, 1.442695
      %v1259 = vpow.pop %v1258
      %v1260 = vmul.f32 %v1168, 1.442695
      %v1261 = vpow.pop %v1260
      %v1262 = vmul.f32 %v1169, 1.442695
      %v1263 = vpow.pop %v1262
      %v1264 = vmul.f32 %v1170, 1.442695
      %v1265 = vpow.pop %v1264
      %v1266 = vmul.f32 %v1171, 1.442695
      %v1267 = vpow.pop %v1266
      %v1268 = vmul.f32 %v1172, 1.442695
      %v1269 = vpow.pop %v1268
      %v1270 = vmul.f32 %v1173, 1.442695
      %v1271 = vpow.pop %v1270
      %v1272 = vmul.f32 %v1174, 1.442695
      %v1273 = vpow.pop %v1272
      %v1274 = vmul.f32 %v1175, 1.442695
      %v1275 = vpow.pop %v1274
      %v1276 = vmul.f32 %v1176, 1.442695
      %v1277 = vpow.pop %v1276
      %v1278 = vmul.f32 %v1177, 1.442695
      %v1279 = vpow.pop %v1278
      %v1280 = vmul.f32 %v1178, 1.442695
      %v1281 = vpow.pop %v1280
      %v1282 = vmul.f32 %v1179, 1.442695
      %v1283 = vpow.pop %v1282
      %v1284 = vmul.f32 %v1180, 1.442695
      %v1285 = vpow.pop %v1284
      %v1286 = vmul.f32 %v1181, 1.442695
      %v1287 = vpow.pop %v1286
      %v1288 = vmul.f32 %v1182, 1.442695
      %v1289 = vpow.pop %v1288
      %v1290 = vmul.f32 %v1183, 1.442695
      %v1291 = vpow.pop %v1290
      %v1292 = vmul.f32 %v1184, 1.442695
      %v1293 = vpow.pop %v1292
      %v1294 = vmul.f32 %v1185, 1.442695
      %v1295 = vpow.pop %v1294
      %v1296 = vmul.f32 %v1186, 1.442695
      %v1297 = vpow.pop %v1296
      %v1298 = vmul.f32 %v1187, 1.442695
      %v1299 = vpow.pop %v1298
      %v1300 = vmul.f32 %v1188, 1.442695
      %v1301 = vpow.pop %v1300
      %v1302 = vmul.f32 %v1189, 1.442695
      %v1303 = vpow.pop %v1302
      %v1304 = vmul.f32 %v1190, 1.442695
      %v1305 = vpow.pop %v1304
      %v1306 = vmul.f32 %v1191, 1.442695
      %v1307 = vpow.pop %v1306
      %v1308 = vmul.f32 %v1192, 1.442695
      %v1309 = vpow.pop %v1308
      %v1310 = vmul.f32 %v1193, 1.442695
      %v1311 = vpow.pop %v1310
      %v1312 = vmul.f32 %v1194, 1.442695
      %v1313 = vpow.pop %v1312
      %v1314 = vmul.f32 %v1195, 1.442695
      %v1315 = vpow.pop %v1314
      %v1316 = vmul.f32 %v1196, 1.442695
      %v1317 = vpow.pop %v1316
      %v1318 = vmul.f32 %v1197, 1.442695
      %v1319 = vpow.pop %v1318
      %v1320 = vmul.f32 %v1198, 1.442695
      %v1321 = vpow.pop %v1320
      %v1322 = vmul.f32 %v1199, 1.442695
      %v1323 = vpow.pop %v1322
      %v1324 = vmul.f32 %v1200, 1.442695
      %v1325 = vpow.pop %v1324
      %v1326 = vmul.f32 %v1201, 1.442695
      %v1327 = vpow.pop %v1326
      %v1328 = vmul.f32 %v1202, 1.442695
      %v1329 = vpow.pop %v1328
      %v1330 = vmul.f32 %v1203, 1.442695
      %v1331 = vpow.pop %v1330
      %v1332 = vadd.f32 %v1205, %v1207
      %1333 = vadd.xlane.f32.xlu0 %v1332
      %v1334 = vpop.xlane.xlu0 %1333
      %v1335 = vadd.f32 %v1209, %v1211
      %1336 = vadd.xlane.f32.xlu0 %v1335
      %v1337 = vpop.xlane.xlu0 %1336
      %v1338 = vadd.f32 %v1213, %v1215
      %1339 = vadd.xlane.f32.xlu0 %v1338
      %v1340 = vpop.xlane.xlu0 %1339
      %v1341 = vadd.f32 %v1217, %v1219
      %1342 = vadd.xlane.f32.xlu0 %v1341
      %v1343 = vpop.xlane.xlu0 %1342
      %v1344 = vadd.f32 %v1221, %v1223
      %1345 = vadd.xlane.f32.xlu0 %v1344
      %v1346 = vpop.xlane.xlu0 %1345
      %v1347 = vadd.f32 %v1225, %v1227
      %1348 = vadd.xlane.f32.xlu0 %v1347
      %v1349 = vpop.xlane.xlu0 %1348
      %v1350 = vadd.f32 %v1229, %v1231
      %1351 = vadd.xlane.f32.xlu0 %v1350
      %v1352 = vpop.xlane.xlu0 %1351
      %v1353 = vadd.f32 %v1233, %v1235
      %1354 = vadd.xlane.f32.xlu0 %v1353
      %v1355 = vpop.xlane.xlu0 %1354
      %v1356 = vadd.f32 %v1237, %v1239
      %1357 = vadd.xlane.f32.xlu0 %v1356
      %v1358 = vpop.xlane.xlu0 %1357
      %v1359 = vadd.f32 %v1241, %v1243
      %1360 = vadd.xlane.f32.xlu0 %v1359
      %v1361 = vpop.xlane.xlu0 %1360
      %v1362 = vadd.f32 %v1245, %v1247
      %1363 = vadd.xlane.f32.xlu0 %v1362
      %v1364 = vpop.xlane.xlu0 %1363
      %v1365 = vadd.f32 %v1249, %v1251
      %1366 = vadd.xlane.f32.xlu0 %v1365
      %v1367 = vpop.xlane.xlu0 %1366
      %v1368 = vadd.f32 %v1253, %v1255
      %1369 = vadd.xlane.f32.xlu0 %v1368
      %v1370 = vpop.xlane.xlu0 %1369
      %v1371 = vadd.f32 %v1257, %v1259
      %1372 = vadd.xlane.f32.xlu0 %v1371
      %v1373 = vpop.xlane.xlu0 %1372
      %v1374 = vadd.f32 %v1261, %v1263
      %1375 = vadd.xlane.f32.xlu0 %v1374
      %v1376 = vpop.xlane.xlu0 %1375
      %v1377 = vadd.f32 %v1265, %v1267
      %1378 = vadd.xlane.f32.xlu0 %v1377
      %v1379 = vpop.xlane.xlu0 %1378
      %v1380 = vadd.f32 %v1269, %v1271
      %1381 = vadd.xlane.f32.xlu0 %v1380
      %v1382 = vpop.xlane.xlu0 %1381
      %v1383 = vadd.f32 %v1273, %v1275
      %1384 = vadd.xlane.f32.xlu0 %v1383
      %v1385 = vpop.xlane.xlu0 %1384
      %v1386 = vadd.f32 %v1277, %v1279
      %1387 = vadd.xlane.f32.xlu0 %v1386
      %v1388 = vpop.xlane.xlu0 %1387
      %v1389 = vadd.f32 %v1281, %v1283
      %1390 = vadd.xlane.f32.xlu0 %v1389
      %v1391 = vpop.xlane.xlu0 %1390
      %v1392 = vadd.f32 %v1285, %v1287
      %1393 = vadd.xlane.f32.xlu0 %v1392
      %v1394 = vpop.xlane.xlu0 %1393
      %v1395 = vadd.f32 %v1289, %v1291
      %1396 = vadd.xlane.f32.xlu0 %v1395
      %v1397 = vpop.xlane.xlu0 %1396
      %v1398 = vadd.f32 %v1293, %v1295
      %1399 = vadd.xlane.f32.xlu0 %v1398
      %v1400 = vpop.xlane.xlu0 %1399
      %v1401 = vadd.f32 %v1297, %v1299
      %1402 = vadd.xlane.f32.xlu0 %v1401
      %v1403 = vpop.xlane.xlu0 %1402
      %v1404 = vadd.f32 %v1301, %v1303
      %1405 = vadd.xlane.f32.xlu0 %v1404
      %v1406 = vpop.xlane.xlu0 %1405
      %v1407 = vadd.f32 %v1305, %v1307
      %1408 = vadd.xlane.f32.xlu0 %v1407
      %v1409 = vpop.xlane.xlu0 %1408
      %v1410 = vadd.f32 %v1309, %v1311
      %1411 = vadd.xlane.f32.xlu0 %v1410
      %v1412 = vpop.xlane.xlu0 %1411
      %v1413 = vadd.f32 %v1313, %v1315
      %1414 = vadd.xlane.f32.xlu0 %v1413
      %v1415 = vpop.xlane.xlu0 %1414
      %v1416 = vadd.f32 %v1317, %v1319
      %1417 = vadd.xlane.f32.xlu0 %v1416
      %v1418 = vpop.xlane.xlu0 %1417
      %v1419 = vadd.f32 %v1321, %v1323
      %1420 = vadd.xlane.f32.xlu0 %v1419
      %v1421 = vpop.xlane.xlu0 %1420
      %v1422 = vadd.f32 %v1325, %v1327
      %1423 = vadd.xlane.f32.xlu0 %v1422
      %v1424 = vpop.xlane.xlu0 %1423
      %v1425 = vadd.f32 %v1329, %v1331
      %1426 = vadd.xlane.f32.xlu0 %v1425
      %v1427 = vpop.xlane.xlu0 %1426
      %v1428 = vrcp.pop %v1334
      %v1429 = vrcp.pop %v1337
      %v1430 = vrcp.pop %v1340
      %v1431 = vrcp.pop %v1343
      %v1432 = vrcp.pop %v1346
      %v1433 = vrcp.pop %v1349
      %v1434 = vrcp.pop %v1352
      %v1435 = vrcp.pop %v1355
      %v1436 = vrcp.pop %v1358
      %v1437 = vrcp.pop %v1361
      %v1438 = vrcp.pop %v1364
      %v1439 = vrcp.pop %v1367
      %v1440 = vrcp.pop %v1370
      %v1441 = vrcp.pop %v1373
      %v1442 = vrcp.pop %v1376
      %v1443 = vrcp.pop %v1379
      %v1444 = vrcp.pop %v1382
      %v1445 = vrcp.pop %v1385
      %v1446 = vrcp.pop %v1388
      %v1447 = vrcp.pop %v1391
      %v1448 = vrcp.pop %v1394
      %v1449 = vrcp.pop %v1397
      %v1450 = vrcp.pop %v1400
      %v1451 = vrcp.pop %v1403
      %v1452 = vrcp.pop %v1406
      %v1453 = vrcp.pop %v1409
      %v1454 = vrcp.pop %v1412
      %v1455 = vrcp.pop %v1415
      %v1456 = vrcp.pop %v1418
      %v1457 = vrcp.pop %v1421
      %v1458 = vrcp.pop %v1424
      %v1459 = vrcp.pop %v1427
      %v1460 = vmul.f32 %v1205, %v1428
      %v1461 = vmul.f32 %v1207, %v1428
      %v1462 = vmul.f32 %v1209, %v1429
      %v1463 = vmul.f32 %v1211, %v1429
      %v1464 = vmul.f32 %v1213, %v1430
      %v1465 = vmul.f32 %v1215, %v1430
      %v1466 = vmul.f32 %v1217, %v1431
      %v1467 = vmul.f32 %v1219, %v1431
      %v1468 = vmul.f32 %v1221, %v1432
      %v1469 = vmul.f32 %v1223, %v1432
      %v1470 = vmul.f32 %v1225, %v1433
      %v1471 = vmul.f32 %v1227, %v1433
      %v1472 = vmul.f32 %v1229, %v1434
      %v1473 = vmul.f32 %v1231, %v1434
      %v1474 = vmul.f32 %v1233, %v1435
      %v1475 = vmul.f32 %v1235, %v1435
      %v1476 = vmul.f32 %v1237, %v1436
      %v1477 = vmul.f32 %v1239, %v1436
      %v1478 = vmul.f32 %v1241, %v1437
      %v1479 = vmul.f32 %v1243, %v1437
      %v1480 = vmul.f32 %v1245, %v1438
      %v1481 = vmul.f32 %v1247, %v1438
      %v1482 = vmul.f32 %v1249, %v1439
      %v1483 = vmul.f32 %v1251, %v1439
      %v1484 = vmul.f32 %v1253, %v1440
      %v1485 = vmul.f32 %v1255, %v1440
      %v1486 = vmul.f32 %v1257, %v1441
      %v1487 = vmul.f32 %v1259, %v1441
      %v1488 = vmul.f32 %v1261, %v1442
      %v1489 = vmul.f32 %v1263, %v1442
      %v1490 = vmul.f32 %v1265, %v1443
      %v1491 = vmul.f32 %v1267, %v1443
      %v1492 = vmul.f32 %v1269, %v1444
      %v1493 = vmul.f32 %v1271, %v1444
      %v1494 = vmul.f32 %v1273, %v1445
      %v1495 = vmul.f32 %v1275, %v1445
      %v1496 = vmul.f32 %v1277, %v1446
      %v1497 = vmul.f32 %v1279, %v1446
      %v1498 = vmul.f32 %v1281, %v1447
      %v1499 = vmul.f32 %v1283, %v1447
      %v1500 = vmul.f32 %v1285, %v1448
      %v1501 = vmul.f32 %v1287, %v1448
      %v1502 = vmul.f32 %v1289, %v1449
      %v1503 = vmul.f32 %v1291, %v1449
      %v1504 = vmul.f32 %v1293, %v1450
      %v1505 = vmul.f32 %v1295, %v1450
      %v1506 = vmul.f32 %v1297, %v1451
      %v1507 = vmul.f32 %v1299, %v1451
      %v1508 = vmul.f32 %v1301, %v1452
      %v1509 = vmul.f32 %v1303, %v1452
      %v1510 = vmul.f32 %v1305, %v1453
      %v1511 = vmul.f32 %v1307, %v1453
      %v1512 = vmul.f32 %v1309, %v1454
      %v1513 = vmul.f32 %v1311, %v1454
      %v1514 = vmul.f32 %v1313, %v1455
      %v1515 = vmul.f32 %v1315, %v1455
      %v1516 = vmul.f32 %v1317, %v1456
      %v1517 = vmul.f32 %v1319, %v1456
      %v1518 = vmul.f32 %v1321, %v1457
      %v1519 = vmul.f32 %v1323, %v1457
      %v1520 = vmul.f32 %v1325, %v1458
      %v1521 = vmul.f32 %v1327, %v1458
      %v1522 = vmul.f32 %v1329, %v1459
      %v1523 = vmul.f32 %v1331, %v1459
      %v1524 = vpack.c.bf16 %v1462, %v1460
      %v1525 = vpack.c.bf16 %v1463, %v1461
      %v1526 = vpack.c.bf16 %v1466, %v1464
      %v1527 = vpack.c.bf16 %v1467, %v1465
      %v1528 = vpack.c.bf16 %v1470, %v1468
      %v1529 = vpack.c.bf16 %v1471, %v1469
      %v1530 = vpack.c.bf16 %v1474, %v1472
      %v1531 = vpack.c.bf16 %v1475, %v1473
      %v1532 = vpack.c.bf16 %v1478, %v1476
      %v1533 = vpack.c.bf16 %v1479, %v1477
      %v1534 = vpack.c.bf16 %v1482, %v1480
      %v1535 = vpack.c.bf16 %v1483, %v1481
      %v1536 = vpack.c.bf16 %v1486, %v1484
      %v1537 = vpack.c.bf16 %v1487, %v1485
      %v1538 = vpack.c.bf16 %v1490, %v1488
      %v1539 = vpack.c.bf16 %v1491, %v1489
      %v1540 = vpack.c.bf16 %v1494, %v1492
      %v1541 = vpack.c.bf16 %v1495, %v1493
      %v1542 = vpack.c.bf16 %v1498, %v1496
      %v1543 = vpack.c.bf16 %v1499, %v1497
      %v1544 = vpack.c.bf16 %v1502, %v1500
      %v1545 = vpack.c.bf16 %v1503, %v1501
      %v1546 = vpack.c.bf16 %v1506, %v1504
      %v1547 = vpack.c.bf16 %v1507, %v1505
      %v1548 = vpack.c.bf16 %v1510, %v1508
      %v1549 = vpack.c.bf16 %v1511, %v1509
      %v1550 = vpack.c.bf16 %v1514, %v1512
      %v1551 = vpack.c.bf16 %v1515, %v1513
      %v1552 = vpack.c.bf16 %v1518, %v1516
      %v1553 = vpack.c.bf16 %v1519, %v1517
      %v1554 = vpack.c.bf16 %v1522, %v1520
      %v1555 = vpack.c.bf16 %v1523, %v1521
      %v1556 = vld [vmem:[#allocation3] sm:$0xff]
      %v1557 = vld [vmem:[#allocation3 + $0x8] sm:$0xff]
      %v1558 = vld [vmem:[#allocation3 + $0x10] sm:$0xff]
      %v1559 = vld [vmem:[#allocation3 + $0x18] sm:$0xff]
      %v1560 = vld [vmem:[#allocation3 + $0x20] sm:$0xff]
      %v1561 = vld [vmem:[#allocation3 + $0x28] sm:$0xff]
      %v1562 = vld [vmem:[#allocation3 + $0x30] sm:$0xff]
      %v1563 = vld [vmem:[#allocation3 + $0x38] sm:$0xff]
      %v1564 = vld [vmem:[%s6] sm:$0xff]
      %v1565 = vld [vmem:[%s6 + $0x8] sm:$0xff]
      %v1566 = vld [vmem:[%s6 + $0x10] sm:$0xff]
      %v1567 = vld [vmem:[%s6 + $0x18] sm:$0xff]
      %v1568 = vld [vmem:[%s6 + $0x20] sm:$0xff]
      %v1569 = vld [vmem:[%s6 + $0x28] sm:$0xff]
      %v1570 = vld [vmem:[%s6 + $0x30] sm:$0xff]
      %v1571 = vld [vmem:[%s6 + $0x38] sm:$0xff]
      %1573 = vset.pattern.permute.xlu0 0
      %1574 = vperm.xlu0 %1573, %v1564
      %v1575 = vpop.permute.xlu0 %1574
      %1578 = vset.pattern.permute.xlu0 0
      %1579 = vperm.xlu0 %1578, %v1565
      %v1580 = vpop.permute.xlu0 %1579
      %1583 = vset.pattern.permute.xlu0 0
      %1584 = vperm.xlu0 %1583, %v1566
      %v1585 = vpop.permute.xlu0 %1584
      %1588 = vset.pattern.permute.xlu0 0
      %1589 = vperm.xlu0 %1588, %v1567
      %v1590 = vpop.permute.xlu0 %1589
      %1593 = vset.pattern.permute.xlu0 0
      %1594 = vperm.xlu0 %1593, %v1568
      %v1595 = vpop.permute.xlu0 %1594
      %1598 = vset.pattern.permute.xlu0 0
      %1599 = vperm.xlu0 %1598, %v1569
      %v1600 = vpop.permute.xlu0 %1599
      %1603 = vset.pattern.permute.xlu0 0
      %1604 = vperm.xlu0 %1603, %v1570
      %v1605 = vpop.permute.xlu0 %1604
      %1608 = vset.pattern.permute.xlu0 0
      %1609 = vperm.xlu0 %1608, %v1571
      %v1610 = vpop.permute.xlu0 %1609
      %1612 = vmatprep.subr.bf16.mxu0 %v1525
      %1613 = vmatpush1.bf16.xpose.msra.mxu0 %v1524
      %1614 = vmatprep.subr.bf16.mxu0 %v1527
      %1615 = vmatpush1.bf16.xpose.msra.mxu0 %v1526
      %1616 = vmatprep.subr.bf16.mxu0 %v1529
      %1617 = vmatpush1.bf16.xpose.msra.mxu0 %v1528
      %1618 = vmatprep.subr.bf16.mxu0 %v1531
      %1619 = vmatpush1.bf16.xpose.msra.mxu0 %v1530
      %1620 = vmatprep.subr.bf16.mxu0 %v1533
      %1621 = vmatpush1.bf16.xpose.msra.mxu0 %v1532
      %1622 = vmatprep.subr.bf16.mxu0 %v1535
      %1623 = vmatpush1.bf16.xpose.msra.mxu0 %v1534
      %1624 = vmatprep.subr.bf16.mxu0 %v1537
      %1625 = vmatpush1.bf16.xpose.msra.mxu0 %v1536
      %1626 = vmatprep.subr.bf16.mxu0 %v1539
      %1627 = vmatpush1.bf16.xpose.msra.mxu0 %v1538
      %1628 = vmatprep.subr.bf16.mxu0 %v1541
      %1629 = vmatpush1.bf16.xpose.msra.mxu0 %v1540
      %1630 = vmatprep.subr.bf16.mxu0 %v1543
      %1631 = vmatpush1.bf16.xpose.msra.mxu0 %v1542
      %1632 = vmatprep.subr.bf16.mxu0 %v1545
      %1633 = vmatpush1.bf16.xpose.msra.mxu0 %v1544
      %1634 = vmatprep.subr.bf16.mxu0 %v1547
      %1635 = vmatpush1.bf16.xpose.msra.mxu0 %v1546
      %1636 = vmatprep.subr.bf16.mxu0 %v1549
      %1637 = vmatpush1.bf16.xpose.msra.mxu0 %v1548
      %1638 = vmatprep.subr.bf16.mxu0 %v1551
      %1639 = vmatpush1.bf16.xpose.msra.mxu0 %v1550
      %1640 = vmatprep.subr.bf16.mxu0 %v1553
      %1641 = vmatpush1.bf16.xpose.msra.mxu0 %v1552
      %1642 = vmatprep.subr.bf16.mxu0 %v1555
      %1643 = vmatpush1.bf16.xpose.msra.mxu0 %v1554
      %1644 = vmatprep.mubr.bf16.mxu0 %v1557
      %1645 = vmatmul.mubr.bf16.gmra.mrb[0].mxu0 %v1556
      %v1646 = vpop.f32.mrb[0].mxu0
      %v1647 = vadd.f32 %v1575, %v1646
      %v1648 = vpop.f32.mrb[0].mxu0
      %v1649 = vadd.f32 %v1575, %v1648
      %v1650 = vpop.f32.mrb[0].mxu0
      %v1651 = vadd.f32 %v1580, %v1650
      %v1652 = vpop.f32.mrb[0].mxu0
      %v1653 = vadd.f32 %v1580, %v1652
      %1654 = vmatprep.mubr.bf16.mxu0 %v1559
      %1655 = vmatmul.mubr.bf16.gmra.mrb[0].mxu0 %v1558
      %v1656 = vpop.f32.mrb[0].mxu0
      %v1657 = vadd.f32 %v1585, %v1656
      %v1658 = vpop.f32.mrb[0].mxu0
      %v1659 = vadd.f32 %v1585, %v1658
      %v1660 = vpop.f32.mrb[0].mxu0
      %v1661 = vadd.f32 %v1590, %v1660
      %v1662 = vpop.f32.mrb[0].mxu0
      %v1663 = vadd.f32 %v1590, %v1662
      %1664 = vmatprep.mubr.bf16.mxu0 %v1561
      %1665 = vmatmul.mubr.bf16.gmra.mrb[0].mxu0 %v1560
      %v1666 = vpop.f32.mrb[0].mxu0
      %v1667 = vadd.f32 %v1595, %v1666
      %v1668 = vpop.f32.mrb[0].mxu0
      %v1669 = vadd.f32 %v1595, %v1668
      %v1670 = vpop.f32.mrb[0].mxu0
      %v1671 = vadd.f32 %v1600, %v1670
      %v1672 = vpop.f32.mrb[0].mxu0
      %v1673 = vadd.f32 %v1600, %v1672
      %1674 = vmatprep.mubr.bf16.mxu0 %v1563
      %1675 = vmatmul.mubr.bf16.gmra.mrb[0].mxu0 %v1562
      %v1676 = vpop.f32.mrb[0].mxu0
      %v1677 = vadd.f32 %v1605, %v1676
      %v1678 = vpop.f32.mrb[0].mxu0
      %v1679 = vadd.f32 %v1605, %v1678
      %v1680 = vpop.f32.mrb[0].mxu0
      %v1681 = vadd.f32 %v1610, %v1680
      %v1682 = vpop.f32.mrb[0].mxu0
      %v1683 = vadd.f32 %v1610, %v1682
      %1684 = vdwg.mxu0
      %v1685 = vadd.f32 %v1647, %v640
      %v1686 = vadd.f32 %v1649, %v641
      %v1687 = vadd.f32 %v1651, %v642
      %v1688 = vadd.f32 %v1653, %v643
      %v1689 = vadd.f32 %v1657, %v644
      %v1690 = vadd.f32 %v1659, %v645
      %v1691 = vadd.f32 %v1661, %v646
      %v1692 = vadd.f32 %v1663, %v647
      %v1693 = vadd.f32 %v1667, %v648
      %v1694 = vadd.f32 %v1669, %v649
      %v1695 = vadd.f32 %v1671, %v650
      %v1696 = vadd.f32 %v1673, %v651
      %v1697 = vadd.f32 %v1677, %v652
      %v1698 = vadd.f32 %v1679, %v653
      %v1699 = vadd.f32 %v1681, %v654
      %v1700 = vadd.f32 %v1683, %v655
      %1701 = vst [vmem:[%s300] sm:$0xff] %v1685
      %1702 = vst [vmem:[%s300 + $0x8] sm:$0xff] %v1686
      %1703 = vst [vmem:[%s300 + $0x10] sm:$0xff] %v1687
      %1704 = vst [vmem:[%s300 + $0x18] sm:$0xff] %v1688
      %1705 = vst [vmem:[%s300 + $0x20] sm:$0xff] %v1689
      %1706 = vst [vmem:[%s300 + $0x28] sm:$0xff] %v1690
      %1707 = vst [vmem:[%s300 + $0x30] sm:$0xff] %v1691
      %1708 = vst [vmem:[%s300 + $0x38] sm:$0xff] %v1692
      %1709 = vst [vmem:[%s300 + $0x40] sm:$0xff] %v1693
      %1710 = vst [vmem:[%s300 + $0x48] sm:$0xff] %v1694
      %1711 = vst [vmem:[%s300 + $0x50] sm:$0xff] %v1695
      %1712 = vst [vmem:[%s300 + $0x58] sm:$0xff] %v1696
      %1713 = vst [vmem:[%s300 + $0x60] sm:$0xff] %v1697
      %1714 = vst [vmem:[%s300 + $0x68] sm:$0xff] %v1698
      %1715 = vst [vmem:[%s300 + $0x70] sm:$0xff] %v1699
      %1716 = vst [vmem:[%s300 + $0x78] sm:$0xff] %v1700
      %s1717 = smul.u32 2, %s23
      %p1718 = scmp.lt.s32.totalorder %s22, 1
      %s1719 = scalar_select %p1718, %s22, 1
      %p1720 = scmp.lt.s32.totalorder %s1717, 1
      %s1721 = scalar_select %p1720, %s1717, 1
      %s1722 = smul.addr %s1719, 16
      %s1723 = sadd.s32 %s1721, %s1722
      %s1724 = smul.addr %s1723, 8
      %s1725 = scalar_lea.vmem %s7, %s1724
      // Predicated region
      $region53: #{nonlocal_block.1} parent=47 // pred_check
        %p1726 = pneg %p202
      $region54: #{nonlocal_block.1} parent=47 // pred_check_branch
        %1728 = sbr.rel (%p1726) target = $region56
      $region55: #{nonlocal_block.1} parent=47 // pred_region
        %s1729 = smul.u32 2, %s23
      $region56: #{nonlocal_block.1} parent=47 // pred_fallthru
        _
    $region48: #{nonlocal_block.1} parent=5 // pred_fallthru
      _
    %p1730 = scmp.le.s32.totalorder 2, %s13
    // Predicated region
    $region57: #{nonlocal_block.1} parent=5 // pred_check
      %p1731 = pneg %p1730
    $region58: #{nonlocal_block.1} parent=5 // pred_check_branch
      %1733 = sbr.rel (%p1731) target = $region60
    $region59: #{nonlocal_block.1} parent=5 // pred_region
      %s1734 = ssub.s32 %s13, 2
      // Predicated region
      $region61: #{nonlocal_block.1} parent=59 // pred_check
        %p1735 = pneg %p208
      $region62: #{nonlocal_block.1} parent=59 // pred_check_branch
        %1737 = sbr.rel (%p1735) target = $region64
      $region63: #{nonlocal_block.1} parent=59 // pred_region
        %s1738 = smul.u32 2, %s25
        %p1739 = scmp.lt.s32.totalorder %s24, 1
        %s1740 = scalar_select %p1739, %s24, 1
        %p1741 = scmp.lt.s32.totalorder %s1738, 1
        %s1742 = scalar_select %p1741, %s1738, 1
        %s1743 = smul.addr %s1740, 16
        %s1744 = sadd.s32 %s1742, %s1743
        %s1745 = smul.addr %s1744, 8
        %s1746 = scalar_lea.vmem %s7, %s1745
      $region64: #{nonlocal_block.1} parent=59 // pred_fallthru
        _
    $region60: #{nonlocal_block.1} parent=5 // pred_fallthru
      _
  $region6: #{nonlocal_block.1} parent=0 // loop_footer
    %s17 = sadd.s32 1, %s13
  $region7: #{nonlocal_block.1} parent=0 // loop_footer_branch
    %12 = sbr.rel target = $region3
  $region8: #{nonlocal_block.1} parent=0 // loop_exit
    _

</llo_original>
